<compile_context>
chip_gen: v7x
topology: tpu7x:2x2x1
jax: 0.10.0
libtpu: 0.0.40
codegen_flags: <defaults>
</compile_context>

<pallas_src>
import functools

import jax
import jax.numpy as jnp
from jax import lax
from jax.experimental import pallas as pl
from jax.experimental.pallas import tpu as pltpu


def _encoder_kernel(*refs, has_mask: bool, tiled_seq: bool, f_chunk: int,
                    eps: float = 1e-5):
    it = iter(refs)
    xq_ref = next(it)                            # (1, TQ, E) query-row tile of x
    xf_ref = next(it) if tiled_seq else xq_ref   # (1, S, E) full-sequence x (K/V source)
    m_ref = next(it) if has_mask else None       # (1, TQ, S) pre-scaled additive mask
    (wq_ref, wk_ref, wv_ref, wo_ref,
     g1_ref, b1_ref,
     wf1_ref, bf1_ref, wf2_ref, bf2_ref,
     g2_ref, b2_ref,
     o_ref) = tuple(it)

    xq = xq_ref[0]                               # (TQ, E) f32
    xf = xf_ref[0]                               # (S,  E) f32
    TQ, E = xq.shape
    n_heads = wq_ref.shape[0]
    F = wf1_ref.shape[1]

    xq_b = xq.astype(jnp.bfloat16)
    xf_b = xf.astype(jnp.bfloat16)
    mask = m_ref[0] if has_mask else None        # (TQ, S), already * 1/sqrt(dh)

    # ---- multi-head attention; heads accumulated straight through the output
    #      projection (no concat, no lane-offset activation slices) ----
    attn_out = jnp.zeros((TQ, E), jnp.float32)
    for h in range(n_heads):
        qh = jnp.dot(xq_b, wq_ref[h], preferred_element_type=jnp.float32)  # (TQ, dh), scale folded in
        kh = jnp.dot(xf_b, wk_ref[h], preferred_element_type=jnp.float32)  # (S, dh)
        vh = jnp.dot(xf_b, wv_ref[h], preferred_element_type=jnp.float32)  # (S, dh)

        # scores = (Q*scale) @ K^T  (contraction on dh, no explicit transpose op)
        s = lax.dot_general(qh.astype(jnp.bfloat16), kh.astype(jnp.bfloat16),
                            (((1,), (1,)), ((), ())),
                            preferred_element_type=jnp.float32)            # (TQ, S)
        if has_mask:
            s = s + mask

        s_max = jnp.max(s, axis=-1, keepdims=True)
        p = jnp.exp(s - s_max)
        denom = jnp.sum(p, axis=-1, keepdims=True)
        inv = pl.reciprocal(denom, approx=True)
        attn = p * inv
        # torch.nan_to_num: NaN after softmax can only occur for whole rows
        # (denom NaN / 0), so guard per row instead of an (S,S) isnan+select.
        attn = jnp.where(jnp.isnan(denom) | (denom == 0.0), 0.0, attn)

        oh = jnp.dot(attn.astype(jnp.bfloat16), vh.astype(jnp.bfloat16),
                     preferred_element_type=jnp.float32)                   # (TQ, dh)
        attn_out = attn_out + jnp.dot(oh.astype(jnp.bfloat16), wo_ref[h],
                                      preferred_element_type=jnp.float32)  # (TQ, E)

    # ---- residual + LayerNorm1 (f32 element-wise math) ----
    h1 = xq + attn_out
    mu1 = jnp.mean(h1, axis=-1, keepdims=True)
    var1 = jnp.mean(jnp.square(h1 - mu1), axis=-1, keepdims=True)
    y1 = (h1 - mu1) * lax.rsqrt(var1 + eps) * g1_ref[...] + b1_ref[...]

    # ---- feed-forward: Linear -> ReLU -> Linear, chunked over F ----
    y1_b = y1.astype(jnp.bfloat16)
    ff = jnp.zeros((TQ, E), jnp.float32)
    for f0 in range(0, F, f_chunk):
        f1 = min(f0 + f_chunk, F)
        hh = jnp.dot(y1_b, wf1_ref[:, f0:f1],
                     preferred_element_type=jnp.float32) + bf1_ref[:, f0:f1]
        hh = jnp.maximum(hh, 0.0)
        ff = ff + jnp.dot(hh.astype(jnp.bfloat16), wf2_ref[f0:f1, :],
                          preferred_element_type=jnp.float32)
    ff = ff + bf2_ref[...]

    # ---- residual + LayerNorm2 (f32) ----
    h2 = y1 + ff
    mu2 = jnp.mean(h2, axis=-1, keepdims=True)
    var2 = jnp.mean(jnp.square(h2 - mu2), axis=-1, keepdims=True)
    y2 = (h2 - mu2) * lax.rsqrt(var2 + eps) * g2_ref[...] + b2_ref[...]

    o_ref[0] = y2.astype(o_ref.dtype)


def _pick_seq_tile(S: int) -> int:
    # Bound the (TQ,S) score block / (TQ,F) FFN hidden per grid step (v7x 64 MiB
    # VMEM) and expose a second parallel grid axis when the batch is small.
    for t in (512, 256, 128):
        if S > t and S % t == 0:
            return t
    return S


def encoder_forward(x, params, attn_mask=None, *, q_tile=None, f_chunk=None):
    """x: (B, S, E) float32.  attn_mask: optional (B, S, S) additive float mask."""
    B, S, E = x.shape
    n_heads = params["n_heads"]
    assert E % n_heads == 0, "d_model must be divisible by n_heads"
    dh = E // n_heads
    F = params["wf1"].shape[0]
    scale = 1.0 / float(dh) ** 0.5   # reference divides (mask + QK^T) by sqrt(d_heads)

    TQ = q_tile or _pick_seq_tile(S)
    assert S % TQ == 0, "q_tile must divide the sequence length"
    num_q_tiles = S // TQ
    tiled_seq = num_q_tiles > 1
    has_mask = attn_mask is not None
    f_chunk = f_chunk or min(F, 1024)

    # --- one-time, wrapper-side (plain XLA) weight preparation -----------------
    # PyTorch Linear weights are (out, in); the kernel wants plain x @ W, so all
    # transposes happen here.  Heads become the leading (major) dim so the kernel
    # indexes them cheaply.  1/sqrt(dh) is folded into Wq.  Matmul operands -> bf16.
    bf16 = jnp.bfloat16
    wqT = params["wq"].T.astype(jnp.float32) * scale                     # (E, E)
    wq_h = wqT.reshape(E, n_heads, dh).transpose(1, 0, 2).astype(bf16)   # (H, E, dh)
    wk_h = params["wk"].T.reshape(E, n_heads, dh).transpose(1, 0, 2).astype(bf16)
    wv_h = params["wv"].T.reshape(E, n_heads, dh).transpose(1, 0, 2).astype(bf16)
    wo_h = params["wo"].T.reshape(n_heads, dh, E).astype(bf16)           # (H, dh, E)
    wf1T = params["wf1"].T.astype(bf16)                                  # (E, F)
    wf2T = params["wf2"].T.astype(bf16)                                  # (F, E)

    g1 = params["ln1_g"].reshape(1, E).astype(jnp.float32)
    b1 = params["ln1_b"].reshape(1, E).astype(jnp.float32)
    bf1 = params["ff_b1"].reshape(1, F).astype(jnp.float32)
    bf2 = params["ff_b2"].reshape(1, E).astype(jnp.float32)
    g2 = params["ln2_g"].reshape(1, E).astype(jnp.float32)
    b2 = params["ln2_b"].reshape(1, E).astype(jnp.float32)

    const = lambda shape: pl.BlockSpec(shape, lambda b, qi: (0,) * len(shape))

    in_specs = [pl.BlockSpec((1, TQ, E), lambda b, qi: (b, qi, 0))]        # x (query tile)
    inputs = [x]
    if tiled_seq:
        in_specs.append(pl.BlockSpec((1, S, E), lambda b, qi: (b, 0, 0)))  # x (full seq for K/V)
        inputs.append(x)
    if has_mask:
        # Fold the 1/sqrt(dh) scale into the mask (reference adds mask BEFORE scaling).
        in_specs.append(pl.BlockSpec((1, TQ, S), lambda b, qi: (b, qi, 0)))
        inputs.append((attn_mask * scale).astype(jnp.float32))
    in_specs += [
        const((n_heads, E, dh)), const((n_heads, E, dh)), const((n_heads, E, dh)),
        const((n_heads, dh, E)),
        const((1, E)), const((1, E)),
        const((E, F)), const((1, F)), const((F, E)), const((1, E)),
        const((1, E)), const((1, E)),
    ]
    inputs += [wq_h, wk_h, wv_h, wo_h, g1, b1, wf1T, bf1, wf2T, bf2, g2, b2]

    # --- explicit VMEM budget (capped at 64 MiB to stay within v7x physical) ---
    act_bytes = 4 * (2 * TQ * E + (S * E if tiled_seq else 0)
                     + (TQ * S if has_mask else 0))
    wgt_bytes = 2 * (4 * E * E + 2 * E * F) + 4 * (5 * E + F)
    work_bytes = 4 * (TQ * S + 3 * S * dh + 3 * TQ * E + TQ * min(F, f_chunk))
    est = 2 * act_bytes + 2 * wgt_bytes + 2 * work_bytes + (4 << 20)
    vmem_limit = int(min(64 << 20, max(32 << 20, est)))

    kernel = functools.partial(_encoder_kernel, has_mask=has_mask,
                               tiled_seq=tiled_seq, f_chunk=f_chunk)

    out = pl.pallas_call(
        kernel,
        out_shape=jax.ShapeDtypeStruct((B, S, E), x.dtype),
        grid_spec=pltpu.PrefetchScalarGridSpec(
            num_scalar_prefetch=0,
            grid=(B, num_q_tiles),
            in_specs=in_specs,
            out_specs=pl.BlockSpec((1, TQ, E), lambda b, qi: (b, qi, 0)),
        ),
        compiler_params=pltpu.CompilerParams(
            dimension_semantics=("parallel", "parallel"),
            vmem_limit_bytes=vmem_limit),
    )(*inputs)
    return out


def init_params(key, d_model, n_heads, dim_feedforward):
    ks = jax.random.split(key, 6)
    scale = 0.05
    return {
        "n_heads": n_heads,
        "wq": scale * jax.random.normal(ks[0], (d_model, d_model), jnp.float32),
        "wk": scale * jax.random.normal(ks[1], (d_model, d_model), jnp.float32),
        "wv": scale * jax.random.normal(ks[2], (d_model, d_model), jnp.float32),
        "wo": scale * jax.random.normal(ks[3], (d_model, d_model), jnp.float32),
        "ln1_g": jnp.ones((d_model,), jnp.float32),
        "ln1_b": jnp.zeros((d_model,), jnp.float32),
        "wf1": scale * jax.random.normal(ks[4], (dim_feedforward, d_model), jnp.float32),
        "ff_b1": jnp.zeros((dim_feedforward,), jnp.float32),
        "wf2": scale * jax.random.normal(ks[5], (d_model, dim_feedforward), jnp.float32),
        "ff_b2": jnp.zeros((d_model,), jnp.float32),
        "ln2_g": jnp.ones((d_model,), jnp.float32),
        "ln2_b": jnp.zeros((d_model,), jnp.float32),
    }


if __name__ == "__main__":
    B, S = 2, 8
    d_model, n_heads, dim_feedforward = 32, 4, 64

    key = jax.random.PRNGKey(0)
    k_x, k_p = jax.random.split(key)
    x = jax.random.normal(k_x, (B, S, d_model), jnp.float32)
    params = init_params(k_p, d_model, n_heads, dim_feedforward)

    out = encoder_forward(x, params)          # attn_mask=None -> no mask DMA at all
    jax.block_until_ready(out)
    assert out.shape == (B, S, d_model)
    print("KERNEL_OK")
</pallas_src>

<mosaic_0001>
module attributes {stable_mosaic.version = 11 : i64} {
  func.func @_encoder_kernel(%arg0: i32, %arg1: i32, %arg2: memref<1x8x32xf32, #tpu.memory_space<vmem>>, %arg3: memref<4x32x8xbf16, #tpu.memory_space<vmem>>, %arg4: memref<4x32x8xbf16, #tpu.memory_space<vmem>>, %arg5: memref<4x32x8xbf16, #tpu.memory_space<vmem>>, %arg6: memref<4x8x32xbf16, #tpu.memory_space<vmem>>, %arg7: memref<1x32xf32, #tpu.memory_space<vmem>>, %arg8: memref<1x32xf32, #tpu.memory_space<vmem>>, %arg9: memref<32x64xbf16, #tpu.memory_space<vmem>>, %arg10: memref<1x64xf32, #tpu.memory_space<vmem>>, %arg11: memref<64x32xbf16, #tpu.memory_space<vmem>>, %arg12: memref<1x32xf32, #tpu.memory_space<vmem>>, %arg13: memref<1x32xf32, #tpu.memory_space<vmem>>, %arg14: memref<1x32xf32, #tpu.memory_space<vmem>>, %arg15: memref<1x8x32xf32, #tpu.memory_space<vmem>>) attributes {dimension_semantics = [#tpu.dimension_semantics<parallel>, #tpu.dimension_semantics<parallel>], iteration_bounds = array<i64: 2, 1>, scalar_prefetch = 0 : i64, scratch_operands = 0 : i64, tpu.core_type = #tpu.core_type<tc>, window_params = [{transform_indices = @transform_0, window_bounds = array<i64: 1, 8, 32>}, {pipeline_mode = #tpu.pipeline_mode<synchronous>, transform_indices = @transform_1, window_bounds = array<i64: 4, 32, 8>}, {pipeline_mode = #tpu.pipeline_mode<synchronous>, transform_indices = @transform_2, window_bounds = array<i64: 4, 32, 8>}, {pipeline_mode = #tpu.pipeline_mode<synchronous>, transform_indices = @transform_3, window_bounds = array<i64: 4, 32, 8>}, {pipeline_mode = #tpu.pipeline_mode<synchronous>, transform_indices = @transform_4, window_bounds = array<i64: 4, 8, 32>}, {pipeline_mode = #tpu.pipeline_mode<synchronous>, transform_indices = @transform_5, window_bounds = array<i64: 1, 32>}, {pipeline_mode = #tpu.pipeline_mode<synchronous>, transform_indices = @transform_6, window_bounds = array<i64: 1, 32>}, {pipeline_mode = #tpu.pipeline_mode<synchronous>, transform_indices = @transform_7, window_bounds = array<i64: 32, 64>}, {pipeline_mode = #tpu.pipeline_mode<synchronous>, transform_indices = @transform_8, window_bounds = array<i64: 1, 64>}, {pipeline_mode = #tpu.pipeline_mode<synchronous>, transform_indices = @transform_9, window_bounds = array<i64: 64, 32>}, {pipeline_mode = #tpu.pipeline_mode<synchronous>, transform_indices = @transform_10, window_bounds = array<i64: 1, 32>}, {pipeline_mode = #tpu.pipeline_mode<synchronous>, transform_indices = @transform_11, window_bounds = array<i64: 1, 32>}, {pipeline_mode = #tpu.pipeline_mode<synchronous>, transform_indices = @transform_12, window_bounds = array<i64: 1, 32>}, {transform_indices = @transform_13, window_bounds = array<i64: 1, 8, 32>}]} {
    %c0 = arith.constant 0 : index
    %c0_0 = arith.constant 0 : index
    %c0_1 = arith.constant 0 : index
    %0 = vector.load %arg2[%c0, %c0_0, %c0_1] : memref<1x8x32xf32, #tpu.memory_space<vmem>>, vector<1x8x32xf32>
    %1 = vector.shape_cast %0 : vector<1x8x32xf32> to vector<8x32xf32>
    %c0_2 = arith.constant 0 : index
    %c0_3 = arith.constant 0 : index
    %c0_4 = arith.constant 0 : index
    %2 = vector.load %arg2[%c0_2, %c0_3, %c0_4] : memref<1x8x32xf32, #tpu.memory_space<vmem>>, vector<1x8x32xf32>
    %3 = vector.shape_cast %2 : vector<1x8x32xf32> to vector<8x32xf32>
    %4 = arith.truncf %1 : vector<8x32xf32> to vector<8x32xbf16>
    %5 = arith.truncf %3 : vector<8x32xf32> to vector<8x32xbf16>
    %cst = arith.constant 0.000000e+00 : f32
    %6 = vector.broadcast %cst : f32 to vector<8x32xf32>
    %c0_5 = arith.constant 0 : index
    %c0_6 = arith.constant 0 : index
    %c0_7 = arith.constant 0 : index
    %7 = vector.load %arg3[%c0_5, %c0_6, %c0_7] : memref<4x32x8xbf16, #tpu.memory_space<vmem>>, vector<1x32x8xbf16>
    %8 = vector.shape_cast %7 : vector<1x32x8xbf16> to vector<32x8xbf16>
    %cst_8 = arith.constant dense<0.000000e+00> : vector<8x8xf32>
    %9 = tpu.matmul %4, %8, %cst_8 {dimension_numbers = #tpu.dot_dimension_numbers<[1], [0], [0], [1], [0, 0, 1, 1], [], []>} : vector<8x32xbf16>, vector<32x8xbf16>, vector<8x8xf32> -> vector<8x8xf32>
    %c0_9 = arith.constant 0 : index
    %c0_10 = arith.constant 0 : index
    %c0_11 = arith.constant 0 : index
    %10 = vector.load %arg4[%c0_9, %c0_10, %c0_11] : memref<4x32x8xbf16, #tpu.memory_space<vmem>>, vector<1x32x8xbf16>
    %11 = vector.shape_cast %10 : vector<1x32x8xbf16> to vector<32x8xbf16>
    %cst_12 = arith.constant dense<0.000000e+00> : vector<8x8xf32>
    %12 = tpu.matmul %5, %11, %cst_12 {dimension_numbers = #tpu.dot_dimension_numbers<[1], [0], [0], [1], [0, 0, 1, 1], [], []>} : vector<8x32xbf16>, vector<32x8xbf16>, vector<8x8xf32> -> vector<8x8xf32>
    %c0_13 = arith.constant 0 : index
    %c0_14 = arith.constant 0 : index
    %c0_15 = arith.constant 0 : index
    %13 = vector.load %arg5[%c0_13, %c0_14, %c0_15] : memref<4x32x8xbf16, #tpu.memory_space<vmem>>, vector<1x32x8xbf16>
    %14 = vector.shape_cast %13 : vector<1x32x8xbf16> to vector<32x8xbf16>
    %cst_16 = arith.constant dense<0.000000e+00> : vector<8x8xf32>
    %15 = tpu.matmul %5, %14, %cst_16 {dimension_numbers = #tpu.dot_dimension_numbers<[1], [0], [0], [1], [0, 0, 1, 1], [], []>} : vector<8x32xbf16>, vector<32x8xbf16>, vector<8x8xf32> -> vector<8x8xf32>
    %16 = arith.truncf %9 : vector<8x8xf32> to vector<8x8xbf16>
    %17 = arith.truncf %12 : vector<8x8xf32> to vector<8x8xbf16>
    %cst_17 = arith.constant dense<0.000000e+00> : vector<8x8xf32>
    %18 = tpu.matmul %16, %17, %cst_17 {dimension_numbers = #tpu.dot_dimension_numbers<[1], [1], [0], [0], [0, 0, 1, 0], [], []>} : vector<8x8xbf16>, vector<8x8xbf16>, vector<8x8xf32> -> vector<8x8xf32>
    %cst_18 = arith.constant dense<0xFF800000> : vector<8xf32>
    %19 = vector.multi_reduction <maximumf>, %18, %cst_18 [1] : vector<8x8xf32> to vector<8xf32>
    %20 = vector.shape_cast %19 : vector<8xf32> to vector<8x1xf32>
    %21 = vector.broadcast %20 : vector<8x1xf32> to vector<8x8xf32>
    %22 = arith.subf %18, %21 : vector<8x8xf32>
    %23 = math.exp %22 : vector<8x8xf32>
    %cst_19 = arith.constant dense<0.000000e+00> : vector<8xf32>
    %24 = vector.multi_reduction <add>, %23, %cst_19 [1] : vector<8x8xf32> to vector<8xf32>
    %25 = vector.shape_cast %24 : vector<8xf32> to vector<8x1xf32>
    %26 = tpu.reciprocal %25 {approx = true} : vector<8x1xf32> -> vector<8x1xf32>
    %27 = vector.broadcast %26 : vector<8x1xf32> to vector<8x8xf32>
    %28 = arith.mulf %23, %27 : vector<8x8xf32>
    %29 = arith.cmpf one, %25, %25 : vector<8x1xf32>
    %cst_20 = arith.constant 0.000000e+00 : f32
    %30 = vector.broadcast %cst_20 : f32 to vector<8x1xf32>
    %31 = arith.cmpf oeq, %25, %30 : vector<8x1xf32>
    %32 = arith.ori %29, %31 : vector<8x1xi1>
    %cst_21 = arith.constant 0.000000e+00 : f32
    %33 = vector.shape_cast %32 : vector<8x1xi1> to vector<8x1xi1>
    %34 = vector.broadcast %33 : vector<8x1xi1> to vector<8x8xi1>
    %35 = vector.broadcast %cst_21 : f32 to vector<8x8xf32>
    %36 = arith.select %34, %35, %28 : vector<8x8xi1>, vector<8x8xf32>
    %37 = arith.truncf %36 : vector<8x8xf32> to vector<8x8xbf16>
    %38 = arith.truncf %15 : vector<8x8xf32> to vector<8x8xbf16>
    %cst_22 = arith.constant dense<0.000000e+00> : vector<8x8xf32>
    %39 = tpu.matmul %37, %38, %cst_22 {dimension_numbers = #tpu.dot_dimension_numbers<[1], [0], [0], [1], [0, 0, 1, 1], [], []>} : vector<8x8xbf16>, vector<8x8xbf16>, vector<8x8xf32> -> vector<8x8xf32>
    %40 = arith.truncf %39 : vector<8x8xf32> to vector<8x8xbf16>
    %c0_23 = arith.constant 0 : index
    %c0_24 = arith.constant 0 : index
    %c0_25 = arith.constant 0 : index
    %41 = vector.load %arg6[%c0_23, %c0_24, %c0_25] : memref<4x8x32xbf16, #tpu.memory_space<vmem>>, vector<1x8x32xbf16>
    %42 = vector.shape_cast %41 : vector<1x8x32xbf16> to vector<8x32xbf16>
    %cst_26 = arith.constant dense<0.000000e+00> : vector<8x32xf32>
    %43 = tpu.matmul %40, %42, %cst_26 {dimension_numbers = #tpu.dot_dimension_numbers<[1], [0], [0], [1], [0, 0, 1, 1], [], []>} : vector<8x8xbf16>, vector<8x32xbf16>, vector<8x32xf32> -> vector<8x32xf32>
    %44 = arith.addf %6, %43 : vector<8x32xf32>
    %c1 = arith.constant 1 : index
    %c0_27 = arith.constant 0 : index
    %c0_28 = arith.constant 0 : index
    %45 = vector.load %arg3[%c1, %c0_27, %c0_28] : memref<4x32x8xbf16, #tpu.memory_space<vmem>>, vector<1x32x8xbf16>
    %46 = vector.shape_cast %45 : vector<1x32x8xbf16> to vector<32x8xbf16>
    %cst_29 = arith.constant dense<0.000000e+00> : vector<8x8xf32>
    %47 = tpu.matmul %4, %46, %cst_29 {dimension_numbers = #tpu.dot_dimension_numbers<[1], [0], [0], [1], [0, 0, 1, 1], [], []>} : vector<8x32xbf16>, vector<32x8xbf16>, vector<8x8xf32> -> vector<8x8xf32>
    %c1_30 = arith.constant 1 : index
    %c0_31 = arith.constant 0 : index
    %c0_32 = arith.constant 0 : index
    %48 = vector.load %arg4[%c1_30, %c0_31, %c0_32] : memref<4x32x8xbf16, #tpu.memory_space<vmem>>, vector<1x32x8xbf16>
    %49 = vector.shape_cast %48 : vector<1x32x8xbf16> to vector<32x8xbf16>
    %cst_33 = arith.constant dense<0.000000e+00> : vector<8x8xf32>
    %50 = tpu.matmul %5, %49, %cst_33 {dimension_numbers = #tpu.dot_dimension_numbers<[1], [0], [0], [1], [0, 0, 1, 1], [], []>} : vector<8x32xbf16>, vector<32x8xbf16>, vector<8x8xf32> -> vector<8x8xf32>
    %c1_34 = arith.constant 1 : index
    %c0_35 = arith.constant 0 : index
    %c0_36 = arith.constant 0 : index
    %51 = vector.load %arg5[%c1_34, %c0_35, %c0_36] : memref<4x32x8xbf16, #tpu.memory_space<vmem>>, vector<1x32x8xbf16>
    %52 = vector.shape_cast %51 : vector<1x32x8xbf16> to vector<32x8xbf16>
    %cst_37 = arith.constant dense<0.000000e+00> : vector<8x8xf32>
    %53 = tpu.matmul %5, %52, %cst_37 {dimension_numbers = #tpu.dot_dimension_numbers<[1], [0], [0], [1], [0, 0, 1, 1], [], []>} : vector<8x32xbf16>, vector<32x8xbf16>, vector<8x8xf32> -> vector<8x8xf32>
    %54 = arith.truncf %47 : vector<8x8xf32> to vector<8x8xbf16>
    %55 = arith.truncf %50 : vector<8x8xf32> to vector<8x8xbf16>
    %cst_38 = arith.constant dense<0.000000e+00> : vector<8x8xf32>
    %56 = tpu.matmul %54, %55, %cst_38 {dimension_numbers = #tpu.dot_dimension_numbers<[1], [1], [0], [0], [0, 0, 1, 0], [], []>} : vector<8x8xbf16>, vector<8x8xbf16>, vector<8x8xf32> -> vector<8x8xf32>
    %cst_39 = arith.constant dense<0xFF800000> : vector<8xf32>
    %57 = vector.multi_reduction <maximumf>, %56, %cst_39 [1] : vector<8x8xf32> to vector<8xf32>
    %58 = vector.shape_cast %57 : vector<8xf32> to vector<8x1xf32>
    %59 = vector.broadcast %58 : vector<8x1xf32> to vector<8x8xf32>
    %60 = arith.subf %56, %59 : vector<8x8xf32>
    %61 = math.exp %60 : vector<8x8xf32>
    %cst_40 = arith.constant dense<0.000000e+00> : vector<8xf32>
    %62 = vector.multi_reduction <add>, %61, %cst_40 [1] : vector<8x8xf32> to vector<8xf32>
    %63 = vector.shape_cast %62 : vector<8xf32> to vector<8x1xf32>
    %64 = tpu.reciprocal %63 {approx = true} : vector<8x1xf32> -> vector<8x1xf32>
    %65 = vector.broadcast %64 : vector<8x1xf32> to vector<8x8xf32>
    %66 = arith.mulf %61, %65 : vector<8x8xf32>
    %67 = arith.cmpf one, %63, %63 : vector<8x1xf32>
    %cst_41 = arith.constant 0.000000e+00 : f32
    %68 = vector.broadcast %cst_41 : f32 to vector<8x1xf32>
    %69 = arith.cmpf oeq, %63, %68 : vector<8x1xf32>
    %70 = arith.ori %67, %69 : vector<8x1xi1>
    %cst_42 = arith.constant 0.000000e+00 : f32
    %71 = vector.shape_cast %70 : vector<8x1xi1> to vector<8x1xi1>
    %72 = vector.broadcast %71 : vector<8x1xi1> to vector<8x8xi1>
    %73 = vector.broadcast %cst_42 : f32 to vector<8x8xf32>
    %74 = arith.select %72, %73, %66 : vector<8x8xi1>, vector<8x8xf32>
    %75 = arith.truncf %74 : vector<8x8xf32> to vector<8x8xbf16>
    %76 = arith.truncf %53 : vector<8x8xf32> to vector<8x8xbf16>
    %cst_43 = arith.constant dense<0.000000e+00> : vector<8x8xf32>
    %77 = tpu.matmul %75, %76, %cst_43 {dimension_numbers = #tpu.dot_dimension_numbers<[1], [0], [0], [1], [0, 0, 1, 1], [], []>} : vector<8x8xbf16>, vector<8x8xbf16>, vector<8x8xf32> -> vector<8x8xf32>
    %78 = arith.truncf %77 : vector<8x8xf32> to vector<8x8xbf16>
    %c1_44 = arith.constant 1 : index
    %c0_45 = arith.constant 0 : index
    %c0_46 = arith.constant 0 : index
    %79 = vector.load %arg6[%c1_44, %c0_45, %c0_46] : memref<4x8x32xbf16, #tpu.memory_space<vmem>>, vector<1x8x32xbf16>
    %80 = vector.shape_cast %79 : vector<1x8x32xbf16> to vector<8x32xbf16>
    %cst_47 = arith.constant dense<0.000000e+00> : vector<8x32xf32>
    %81 = tpu.matmul %78, %80, %cst_47 {dimension_numbers = #tpu.dot_dimension_numbers<[1], [0], [0], [1], [0, 0, 1, 1], [], []>} : vector<8x8xbf16>, vector<8x32xbf16>, vector<8x32xf32> -> vector<8x32xf32>
    %82 = arith.addf %44, %81 : vector<8x32xf32>
    %c2 = arith.constant 2 : index
    %c0_48 = arith.constant 0 : index
    %c0_49 = arith.constant 0 : index
    %83 = vector.load %arg3[%c2, %c0_48, %c0_49] : memref<4x32x8xbf16, #tpu.memory_space<vmem>>, vector<1x32x8xbf16>
    %84 = vector.shape_cast %83 : vector<1x32x8xbf16> to vector<32x8xbf16>
    %cst_50 = arith.constant dense<0.000000e+00> : vector<8x8xf32>
    %85 = tpu.matmul %4, %84, %cst_50 {dimension_numbers = #tpu.dot_dimension_numbers<[1], [0], [0], [1], [0, 0, 1, 1], [], []>} : vector<8x32xbf16>, vector<32x8xbf16>, vector<8x8xf32> -> vector<8x8xf32>
    %c2_51 = arith.constant 2 : index
    %c0_52 = arith.constant 0 : index
    %c0_53 = arith.constant 0 : index
    %86 = vector.load %arg4[%c2_51, %c0_52, %c0_53] : memref<4x32x8xbf16, #tpu.memory_space<vmem>>, vector<1x32x8xbf16>
    %87 = vector.shape_cast %86 : vector<1x32x8xbf16> to vector<32x8xbf16>
    %cst_54 = arith.constant dense<0.000000e+00> : vector<8x8xf32>
    %88 = tpu.matmul %5, %87, %cst_54 {dimension_numbers = #tpu.dot_dimension_numbers<[1], [0], [0], [1], [0, 0, 1, 1], [], []>} : vector<8x32xbf16>, vector<32x8xbf16>, vector<8x8xf32> -> vector<8x8xf32>
    %c2_55 = arith.constant 2 : index
    %c0_56 = arith.constant 0 : index
    %c0_57 = arith.constant 0 : index
    %89 = vector.load %arg5[%c2_55, %c0_56, %c0_57] : memref<4x32x8xbf16, #tpu.memory_space<vmem>>, vector<1x32x8xbf16>
    %90 = vector.shape_cast %89 : vector<1x32x8xbf16> to vector<32x8xbf16>
    %cst_58 = arith.constant dense<0.000000e+00> : vector<8x8xf32>
    %91 = tpu.matmul %5, %90, %cst_58 {dimension_numbers = #tpu.dot_dimension_numbers<[1], [0], [0], [1], [0, 0, 1, 1], [], []>} : vector<8x32xbf16>, vector<32x8xbf16>, vector<8x8xf32> -> vector<8x8xf32>
    %92 = arith.truncf %85 : vector<8x8xf32> to vector<8x8xbf16>
    %93 = arith.truncf %88 : vector<8x8xf32> to vector<8x8xbf16>
    %cst_59 = arith.constant dense<0.000000e+00> : vector<8x8xf32>
    %94 = tpu.matmul %92, %93, %cst_59 {dimension_numbers = #tpu.dot_dimension_numbers<[1], [1], [0], [0], [0, 0, 1, 0], [], []>} : vector<8x8xbf16>, vector<8x8xbf16>, vector<8x8xf32> -> vector<8x8xf32>
    %cst_60 = arith.constant dense<0xFF800000> : vector<8xf32>
    %95 = vector.multi_reduction <maximumf>, %94, %cst_60 [1] : vector<8x8xf32> to vector<8xf32>
    %96 = vector.shape_cast %95 : vector<8xf32> to vector<8x1xf32>
    %97 = vector.broadcast %96 : vector<8x1xf32> to vector<8x8xf32>
    %98 = arith.subf %94, %97 : vector<8x8xf32>
    %99 = math.exp %98 : vector<8x8xf32>
    %cst_61 = arith.constant dense<0.000000e+00> : vector<8xf32>
    %100 = vector.multi_reduction <add>, %99, %cst_61 [1] : vector<8x8xf32> to vector<8xf32>
    %101 = vector.shape_cast %100 : vector<8xf32> to vector<8x1xf32>
    %102 = tpu.reciprocal %101 {approx = true} : vector<8x1xf32> -> vector<8x1xf32>
    %103 = vector.broadcast %102 : vector<8x1xf32> to vector<8x8xf32>
    %104 = arith.mulf %99, %103 : vector<8x8xf32>
    %105 = arith.cmpf one, %101, %101 : vector<8x1xf32>
    %cst_62 = arith.constant 0.000000e+00 : f32
    %106 = vector.broadcast %cst_62 : f32 to vector<8x1xf32>
    %107 = arith.cmpf oeq, %101, %106 : vector<8x1xf32>
    %108 = arith.ori %105, %107 : vector<8x1xi1>
    %cst_63 = arith.constant 0.000000e+00 : f32
    %109 = vector.shape_cast %108 : vector<8x1xi1> to vector<8x1xi1>
    %110 = vector.broadcast %109 : vector<8x1xi1> to vector<8x8xi1>
    %111 = vector.broadcast %cst_63 : f32 to vector<8x8xf32>
    %112 = arith.select %110, %111, %104 : vector<8x8xi1>, vector<8x8xf32>
    %113 = arith.truncf %112 : vector<8x8xf32> to vector<8x8xbf16>
    %114 = arith.truncf %91 : vector<8x8xf32> to vector<8x8xbf16>
    %cst_64 = arith.constant dense<0.000000e+00> : vector<8x8xf32>
    %115 = tpu.matmul %113, %114, %cst_64 {dimension_numbers = #tpu.dot_dimension_numbers<[1], [0], [0], [1], [0, 0, 1, 1], [], []>} : vector<8x8xbf16>, vector<8x8xbf16>, vector<8x8xf32> -> vector<8x8xf32>
    %116 = arith.truncf %115 : vector<8x8xf32> to vector<8x8xbf16>
    %c2_65 = arith.constant 2 : index
    %c0_66 = arith.constant 0 : index
    %c0_67 = arith.constant 0 : index
    %117 = vector.load %arg6[%c2_65, %c0_66, %c0_67] : memref<4x8x32xbf16, #tpu.memory_space<vmem>>, vector<1x8x32xbf16>
    %118 = vector.shape_cast %117 : vector<1x8x32xbf16> to vector<8x32xbf16>
    %cst_68 = arith.constant dense<0.000000e+00> : vector<8x32xf32>
    %119 = tpu.matmul %116, %118, %cst_68 {dimension_numbers = #tpu.dot_dimension_numbers<[1], [0], [0], [1], [0, 0, 1, 1], [], []>} : vector<8x8xbf16>, vector<8x32xbf16>, vector<8x32xf32> -> vector<8x32xf32>
    %120 = arith.addf %82, %119 : vector<8x32xf32>
    %c3 = arith.constant 3 : index
    %c0_69 = arith.constant 0 : index
    %c0_70 = arith.constant 0 : index
    %121 = vector.load %arg3[%c3, %c0_69, %c0_70] : memref<4x32x8xbf16, #tpu.memory_space<vmem>>, vector<1x32x8xbf16>
    %122 = vector.shape_cast %121 : vector<1x32x8xbf16> to vector<32x8xbf16>
    %cst_71 = arith.constant dense<0.000000e+00> : vector<8x8xf32>
    %123 = tpu.matmul %4, %122, %cst_71 {dimension_numbers = #tpu.dot_dimension_numbers<[1], [0], [0], [1], [0, 0, 1, 1], [], []>} : vector<8x32xbf16>, vector<32x8xbf16>, vector<8x8xf32> -> vector<8x8xf32>
    %c3_72 = arith.constant 3 : index
    %c0_73 = arith.constant 0 : index
    %c0_74 = arith.constant 0 : index
    %124 = vector.load %arg4[%c3_72, %c0_73, %c0_74] : memref<4x32x8xbf16, #tpu.memory_space<vmem>>, vector<1x32x8xbf16>
    %125 = vector.shape_cast %124 : vector<1x32x8xbf16> to vector<32x8xbf16>
    %cst_75 = arith.constant dense<0.000000e+00> : vector<8x8xf32>
    %126 = tpu.matmul %5, %125, %cst_75 {dimension_numbers = #tpu.dot_dimension_numbers<[1], [0], [0], [1], [0, 0, 1, 1], [], []>} : vector<8x32xbf16>, vector<32x8xbf16>, vector<8x8xf32> -> vector<8x8xf32>
    %c3_76 = arith.constant 3 : index
    %c0_77 = arith.constant 0 : index
    %c0_78 = arith.constant 0 : index
    %127 = vector.load %arg5[%c3_76, %c0_77, %c0_78] : memref<4x32x8xbf16, #tpu.memory_space<vmem>>, vector<1x32x8xbf16>
    %128 = vector.shape_cast %127 : vector<1x32x8xbf16> to vector<32x8xbf16>
    %cst_79 = arith.constant dense<0.000000e+00> : vector<8x8xf32>
    %129 = tpu.matmul %5, %128, %cst_79 {dimension_numbers = #tpu.dot_dimension_numbers<[1], [0], [0], [1], [0, 0, 1, 1], [], []>} : vector<8x32xbf16>, vector<32x8xbf16>, vector<8x8xf32> -> vector<8x8xf32>
    %130 = arith.truncf %123 : vector<8x8xf32> to vector<8x8xbf16>
    %131 = arith.truncf %126 : vector<8x8xf32> to vector<8x8xbf16>
    %cst_80 = arith.constant dense<0.000000e+00> : vector<8x8xf32>
    %132 = tpu.matmul %130, %131, %cst_80 {dimension_numbers = #tpu.dot_dimension_numbers<[1], [1], [0], [0], [0, 0, 1, 0], [], []>} : vector<8x8xbf16>, vector<8x8xbf16>, vector<8x8xf32> -> vector<8x8xf32>
    %cst_81 = arith.constant dense<0xFF800000> : vector<8xf32>
    %133 = vector.multi_reduction <maximumf>, %132, %cst_81 [1] : vector<8x8xf32> to vector<8xf32>
    %134 = vector.shape_cast %133 : vector<8xf32> to vector<8x1xf32>
    %135 = vector.broadcast %134 : vector<8x1xf32> to vector<8x8xf32>
    %136 = arith.subf %132, %135 : vector<8x8xf32>
    %137 = math.exp %136 : vector<8x8xf32>
    %cst_82 = arith.constant dense<0.000000e+00> : vector<8xf32>
    %138 = vector.multi_reduction <add>, %137, %cst_82 [1] : vector<8x8xf32> to vector<8xf32>
    %139 = vector.shape_cast %138 : vector<8xf32> to vector<8x1xf32>
    %140 = tpu.reciprocal %139 {approx = true} : vector<8x1xf32> -> vector<8x1xf32>
    %141 = vector.broadcast %140 : vector<8x1xf32> to vector<8x8xf32>
    %142 = arith.mulf %137, %141 : vector<8x8xf32>
    %143 = arith.cmpf one, %139, %139 : vector<8x1xf32>
    %cst_83 = arith.constant 0.000000e+00 : f32
    %144 = vector.broadcast %cst_83 : f32 to vector<8x1xf32>
    %145 = arith.cmpf oeq, %139, %144 : vector<8x1xf32>
    %146 = arith.ori %143, %145 : vector<8x1xi1>
    %cst_84 = arith.constant 0.000000e+00 : f32
    %147 = vector.shape_cast %146 : vector<8x1xi1> to vector<8x1xi1>
    %148 = vector.broadcast %147 : vector<8x1xi1> to vector<8x8xi1>
    %149 = vector.broadcast %cst_84 : f32 to vector<8x8xf32>
    %150 = arith.select %148, %149, %142 : vector<8x8xi1>, vector<8x8xf32>
    %151 = arith.truncf %150 : vector<8x8xf32> to vector<8x8xbf16>
    %152 = arith.truncf %129 : vector<8x8xf32> to vector<8x8xbf16>
    %cst_85 = arith.constant dense<0.000000e+00> : vector<8x8xf32>
    %153 = tpu.matmul %151, %152, %cst_85 {dimension_numbers = #tpu.dot_dimension_numbers<[1], [0], [0], [1], [0, 0, 1, 1], [], []>} : vector<8x8xbf16>, vector<8x8xbf16>, vector<8x8xf32> -> vector<8x8xf32>
    %154 = arith.truncf %153 : vector<8x8xf32> to vector<8x8xbf16>
    %c3_86 = arith.constant 3 : index
    %c0_87 = arith.constant 0 : index
    %c0_88 = arith.constant 0 : index
    %155 = vector.load %arg6[%c3_86, %c0_87, %c0_88] : memref<4x8x32xbf16, #tpu.memory_space<vmem>>, vector<1x8x32xbf16>
    %156 = vector.shape_cast %155 : vector<1x8x32xbf16> to vector<8x32xbf16>
    %cst_89 = arith.constant dense<0.000000e+00> : vector<8x32xf32>
    %157 = tpu.matmul %154, %156, %cst_89 {dimension_numbers = #tpu.dot_dimension_numbers<[1], [0], [0], [1], [0, 0, 1, 1], [], []>} : vector<8x8xbf16>, vector<8x32xbf16>, vector<8x32xf32> -> vector<8x32xf32>
    %158 = arith.addf %120, %157 : vector<8x32xf32>
    %159 = arith.addf %1, %158 : vector<8x32xf32>
    %cst_90 = arith.constant dense<0.000000e+00> : vector<8xf32>
    %160 = vector.multi_reduction <add>, %159, %cst_90 [1] : vector<8x32xf32> to vector<8xf32>
    %161 = vector.shape_cast %160 : vector<8xf32> to vector<8x1xf32>
    %cst_91 = arith.constant 3.200000e+01 : f32
    %162 = vector.broadcast %cst_91 : f32 to vector<8x1xf32>
    %163 = arith.divf %161, %162 : vector<8x1xf32>
    %164 = vector.broadcast %163 : vector<8x1xf32> to vector<8x32xf32>
    %165 = arith.subf %159, %164 : vector<8x32xf32>
    %166 = arith.mulf %165, %165 : vector<8x32xf32>
    %cst_92 = arith.constant dense<0.000000e+00> : vector<8xf32>
    %167 = vector.multi_reduction <add>, %166, %cst_92 [1] : vector<8x32xf32> to vector<8xf32>
    %168 = vector.shape_cast %167 : vector<8xf32> to vector<8x1xf32>
    %cst_93 = arith.constant 3.200000e+01 : f32
    %169 = vector.broadcast %cst_93 : f32 to vector<8x1xf32>
    %170 = arith.divf %168, %169 : vector<8x1xf32>
    %171 = vector.broadcast %163 : vector<8x1xf32> to vector<8x32xf32>
    %172 = arith.subf %159, %171 : vector<8x32xf32>
    %cst_94 = arith.constant 9.99999974E-6 : f32
    %173 = vector.broadcast %cst_94 : f32 to vector<8x1xf32>
    %174 = arith.addf %170, %173 : vector<8x1xf32>
    %175 = math.rsqrt %174 : vector<8x1xf32>
    %176 = vector.broadcast %175 : vector<8x1xf32> to vector<8x32xf32>
    %177 = arith.mulf %172, %176 : vector<8x32xf32>
    %c0_95 = arith.constant 0 : index
    %c0_96 = arith.constant 0 : index
    %178 = vector.load %arg7[%c0_95, %c0_96] : memref<1x32xf32, #tpu.memory_space<vmem>>, vector<1x32xf32>
    %179 = vector.broadcast %178 : vector<1x32xf32> to vector<8x32xf32>
    %180 = arith.mulf %177, %179 : vector<8x32xf32>
    %c0_97 = arith.constant 0 : index
    %c0_98 = arith.constant 0 : index
    %181 = vector.load %arg8[%c0_97, %c0_98] : memref<1x32xf32, #tpu.memory_space<vmem>>, vector<1x32xf32>
    %182 = vector.broadcast %181 : vector<1x32xf32> to vector<8x32xf32>
    %183 = arith.addf %180, %182 : vector<8x32xf32>
    %184 = arith.truncf %183 : vector<8x32xf32> to vector<8x32xbf16>
    %cst_99 = arith.constant 0.000000e+00 : f32
    %185 = vector.broadcast %cst_99 : f32 to vector<8x32xf32>
    %c0_100 = arith.constant 0 : index
    %c0_101 = arith.constant 0 : index
    %186 = vector.load %arg9[%c0_100, %c0_101] : memref<32x64xbf16, #tpu.memory_space<vmem>>, vector<32x64xbf16>
    %cst_102 = arith.constant dense<0.000000e+00> : vector<8x64xf32>
    %187 = tpu.matmul %184, %186, %cst_102 {dimension_numbers = #tpu.dot_dimension_numbers<[1], [0], [0], [1], [0, 0, 1, 1], [], []>} : vector<8x32xbf16>, vector<32x64xbf16>, vector<8x64xf32> -> vector<8x64xf32>
    %c0_103 = arith.constant 0 : index
    %c0_104 = arith.constant 0 : index
    %188 = vector.load %arg10[%c0_103, %c0_104] : memref<1x64xf32, #tpu.memory_space<vmem>>, vector<1x64xf32>
    %189 = vector.broadcast %188 : vector<1x64xf32> to vector<8x64xf32>
    %190 = arith.addf %187, %189 : vector<8x64xf32>
    %cst_105 = arith.constant 0.000000e+00 : f32
    %191 = vector.broadcast %cst_105 : f32 to vector<8x64xf32>
    %192 = arith.maximumf %190, %191 : vector<8x64xf32>
    %193 = arith.truncf %192 : vector<8x64xf32> to vector<8x64xbf16>
    %c0_106 = arith.constant 0 : index
    %c0_107 = arith.constant 0 : index
    %194 = vector.load %arg11[%c0_106, %c0_107] : memref<64x32xbf16, #tpu.memory_space<vmem>>, vector<64x32xbf16>
    %cst_108 = arith.constant dense<0.000000e+00> : vector<8x32xf32>
    %195 = tpu.matmul %193, %194, %cst_108 {dimension_numbers = #tpu.dot_dimension_numbers<[1], [0], [0], [1], [0, 0, 1, 1], [], []>} : vector<8x64xbf16>, vector<64x32xbf16>, vector<8x32xf32> -> vector<8x32xf32>
    %196 = arith.addf %185, %195 : vector<8x32xf32>
    %c0_109 = arith.constant 0 : index
    %c0_110 = arith.constant 0 : index
    %197 = vector.load %arg12[%c0_109, %c0_110] : memref<1x32xf32, #tpu.memory_space<vmem>>, vector<1x32xf32>
    %198 = vector.broadcast %197 : vector<1x32xf32> to vector<8x32xf32>
    %199 = arith.addf %196, %198 : vector<8x32xf32>
    %200 = arith.addf %183, %199 : vector<8x32xf32>
    %cst_111 = arith.constant dense<0.000000e+00> : vector<8xf32>
    %201 = vector.multi_reduction <add>, %200, %cst_111 [1] : vector<8x32xf32> to vector<8xf32>
    %202 = vector.shape_cast %201 : vector<8xf32> to vector<8x1xf32>
    %cst_112 = arith.constant 3.200000e+01 : f32
    %203 = vector.broadcast %cst_112 : f32 to vector<8x1xf32>
    %204 = arith.divf %202, %203 : vector<8x1xf32>
    %205 = vector.broadcast %204 : vector<8x1xf32> to vector<8x32xf32>
    %206 = arith.subf %200, %205 : vector<8x32xf32>
    %207 = arith.mulf %206, %206 : vector<8x32xf32>
    %cst_113 = arith.constant dense<0.000000e+00> : vector<8xf32>
    %208 = vector.multi_reduction <add>, %207, %cst_113 [1] : vector<8x32xf32> to vector<8xf32>
    %209 = vector.shape_cast %208 : vector<8xf32> to vector<8x1xf32>
    %cst_114 = arith.constant 3.200000e+01 : f32
    %210 = vector.broadcast %cst_114 : f32 to vector<8x1xf32>
    %211 = arith.divf %209, %210 : vector<8x1xf32>
    %212 = vector.broadcast %204 : vector<8x1xf32> to vector<8x32xf32>
    %213 = arith.subf %200, %212 : vector<8x32xf32>
    %cst_115 = arith.constant 9.99999974E-6 : f32
    %214 = vector.broadcast %cst_115 : f32 to vector<8x1xf32>
    %215 = arith.addf %211, %214 : vector<8x1xf32>
    %216 = math.rsqrt %215 : vector<8x1xf32>
    %217 = vector.broadcast %216 : vector<8x1xf32> to vector<8x32xf32>
    %218 = arith.mulf %213, %217 : vector<8x32xf32>
    %c0_116 = arith.constant 0 : index
    %c0_117 = arith.constant 0 : index
    %219 = vector.load %arg13[%c0_116, %c0_117] : memref<1x32xf32, #tpu.memory_space<vmem>>, vector<1x32xf32>
    %220 = vector.broadcast %219 : vector<1x32xf32> to vector<8x32xf32>
    %221 = arith.mulf %218, %220 : vector<8x32xf32>
    %c0_118 = arith.constant 0 : index
    %c0_119 = arith.constant 0 : index
    %222 = vector.load %arg14[%c0_118, %c0_119] : memref<1x32xf32, #tpu.memory_space<vmem>>, vector<1x32xf32>
    %223 = vector.broadcast %222 : vector<1x32xf32> to vector<8x32xf32>
    %224 = arith.addf %221, %223 : vector<8x32xf32>
    %c0_120 = arith.constant 0 : index
    %c0_121 = arith.constant 0 : index
    %c0_122 = arith.constant 0 : index
    %225 = vector.load %arg15[%c0_120, %c0_121, %c0_122] : memref<1x8x32xf32, #tpu.memory_space<vmem>>, vector<1x8x32xf32>
    %226 = vector.shape_cast %225 : vector<1x8x32xf32> to vector<8x32xf32>
    %227 = vector.shape_cast %224 : vector<8x32xf32> to vector<1x8x32xf32>
    tpu.vector_store %arg15[%c0_120, %c0_121, %c0_122], %227 {strides = array<i32>} : memref<1x8x32xf32, #tpu.memory_space<vmem>>, vector<1x8x32xf32>,
    return
  }
  func.func @transform_0(%arg0: i32, %arg1: i32) -> (i32, i32, i32) {
    %c0_i32 = arith.constant 0 : i32
    %c0_i32_0 = arith.constant 0 : i32
    return %arg0, %arg1, %c0_i32 : i32, i32, i32
  }
  func.func @transform_1(%arg0: i32, %arg1: i32) -> (i32, i32, i32) {
    %c0_i32 = arith.constant 0 : i32
    %c0_i32_0 = arith.constant 0 : i32
    %c0_i32_1 = arith.constant 0 : i32
    %c0_i32_2 = arith.constant 0 : i32
    return %c0_i32, %c0_i32_0, %c0_i32_1 : i32, i32, i32
  }
  func.func @transform_2(%arg0: i32, %arg1: i32) -> (i32, i32, i32) {
    %c0_i32 = arith.constant 0 : i32
    %c0_i32_0 = arith.constant 0 : i32
    %c0_i32_1 = arith.constant 0 : i32
    %c0_i32_2 = arith.constant 0 : i32
    return %c0_i32, %c0_i32_0, %c0_i32_1 : i32, i32, i32
  }
  func.func @transform_3(%arg0: i32, %arg1: i32) -> (i32, i32, i32) {
    %c0_i32 = arith.constant 0 : i32
    %c0_i32_0 = arith.constant 0 : i32
    %c0_i32_1 = arith.constant 0 : i32
    %c0_i32_2 = arith.constant 0 : i32
    return %c0_i32, %c0_i32_0, %c0_i32_1 : i32, i32, i32
  }
  func.func @transform_4(%arg0: i32, %arg1: i32) -> (i32, i32, i32) {
    %c0_i32 = arith.constant 0 : i32
    %c0_i32_0 = arith.constant 0 : i32
    %c0_i32_1 = arith.constant 0 : i32
    %c0_i32_2 = arith.constant 0 : i32
    return %c0_i32, %c0_i32_0, %c0_i32_1 : i32, i32, i32
  }
  func.func @transform_5(%arg0: i32, %arg1: i32) -> (i32, i32) {
    %c0_i32 = arith.constant 0 : i32
    %c0_i32_0 = arith.constant 0 : i32
    %c0_i32_1 = arith.constant 0 : i32
    return %c0_i32, %c0_i32_0 : i32, i32
  }
  func.func @transform_6(%arg0: i32, %arg1: i32) -> (i32, i32) {
    %c0_i32 = arith.constant 0 : i32
    %c0_i32_0 = arith.constant 0 : i32
    %c0_i32_1 = arith.constant 0 : i32
    return %c0_i32, %c0_i32_0 : i32, i32
  }
  func.func @transform_7(%arg0: i32, %arg1: i32) -> (i32, i32) {
    %c0_i32 = arith.constant 0 : i32
    %c0_i32_0 = arith.constant 0 : i32
    %c0_i32_1 = arith.constant 0 : i32
    return %c0_i32, %c0_i32_0 : i32, i32
  }
  func.func @transform_8(%arg0: i32, %arg1: i32) -> (i32, i32) {
    %c0_i32 = arith.constant 0 : i32
    %c0_i32_0 = arith.constant 0 : i32
    %c0_i32_1 = arith.constant 0 : i32
    return %c0_i32, %c0_i32_0 : i32, i32
  }
  func.func @transform_9(%arg0: i32, %arg1: i32) -> (i32, i32) {
    %c0_i32 = arith.constant 0 : i32
    %c0_i32_0 = arith.constant 0 : i32
    %c0_i32_1 = arith.constant 0 : i32
    return %c0_i32, %c0_i32_0 : i32, i32
  }
  func.func @transform_10(%arg0: i32, %arg1: i32) -> (i32, i32) {
    %c0_i32 = arith.constant 0 : i32
    %c0_i32_0 = arith.constant 0 : i32
    %c0_i32_1 = arith.constant 0 : i32
    return %c0_i32, %c0_i32_0 : i32, i32
  }
  func.func @transform_11(%arg0: i32, %arg1: i32) -> (i32, i32) {
    %c0_i32 = arith.constant 0 : i32
    %c0_i32_0 = arith.constant 0 : i32
    %c0_i32_1 = arith.constant 0 : i32
    return %c0_i32, %c0_i32_0 : i32, i32
  }
  func.func @transform_12(%arg0: i32, %arg1: i32) -> (i32, i32) {
    %c0_i32 = arith.constant 0 : i32
    %c0_i32_0 = arith.constant 0 : i32
    %c0_i32_1 = arith.constant 0 : i32
    return %c0_i32, %c0_i32_0 : i32, i32
  }
  func.func @transform_13(%arg0: i32, %arg1: i32) -> (i32, i32, i32) {
    %c0_i32 = arith.constant 0 : i32
    %c0_i32_0 = arith.constant 0 : i32
    return %arg0, %arg1, %c0_i32 : i32, i32, i32
  }
}

</mosaic_0001>

<llo_original>
// kernel: tpu_custom_call.1
$region0: #{tpu_custom_call.1}
  #allocation0 [shape = 'u32[]', space=smem, size = 0x4, offset = 0x4, fixed_abs, tag = 'smem constant byte address 0x4 - core index']
  #allocation1 [shape = 'u32[144,128]{1,0:T(1,128)}', space=vmem, size = 0x12000, scoped, tag = 'internal scratch']
  %s0 = inlined_call_operand.vmem [shape: f32[2,8,32], index: 0, kind: input, shape index: {}]
  %s1 = inlined_call_operand.vmem [shape: bf16[4,32,8], index: 1, kind: input, shape index: {}]
  %s2 = inlined_call_operand.vmem [shape: bf16[4,32,8], index: 2, kind: input, shape index: {}]
  %s3 = inlined_call_operand.vmem [shape: bf16[4,32,8], index: 3, kind: input, shape index: {}]
  %s4 = inlined_call_operand.vmem [shape: bf16[4,8,32], index: 4, kind: input, shape index: {}]
  %s5 = inlined_call_operand.vmem [shape: f32[1,32], index: 5, kind: input, shape index: {}]
  %s6 = inlined_call_operand.vmem [shape: f32[1,32], index: 6, kind: input, shape index: {}]
  %s7 = inlined_call_operand.vmem [shape: bf16[32,64], index: 7, kind: input, shape index: {}]
  %s8 = inlined_call_operand.vmem [shape: f32[1,64], index: 8, kind: input, shape index: {}]
  %s9 = inlined_call_operand.vmem [shape: bf16[64,32], index: 9, kind: input, shape index: {}]
  %s10 = inlined_call_operand.vmem [shape: f32[1,32], index: 10, kind: input, shape index: {}]
  %s11 = inlined_call_operand.vmem [shape: f32[1,32], index: 11, kind: input, shape index: {}]
  %s12 = inlined_call_operand.vmem [shape: f32[1,32], index: 12, kind: input, shape index: {}]
  %s13 = inlined_call_operand.hbm [shape: f32[2,8,32], index: 13, kind: output, shape index: {}]
  %s14 = sld [smem:[#allocation0]]
  $region85: #{tpu_custom_call.1} parent=0
    _
  %s16 = ssub.s32 1, %s14
  %s17 = scalar_select 0, %s16, %s14
  $region1: #{tpu_custom_call.1} parent=0
    #allocation2 [shape = 'u8[8192]{0}', space=vmem, size = 0x2000, scoped, tag = 'output window, operand 0']
    #allocation3 [shape = 's32[2]{0}', space=sflag, size = 0x8, scoped, tag = 'scoped memory for tpu_custom_call.1']
    %18 = vsyncpa [#allocation3], 0
    %s19 = scalar_lea.sflag [#allocation3], 1
    %20 = vsyncpa %s19, 0
    loop: start=0, step=1, limit=4
    $region2: #{tpu_custom_call.1} parent=1 // loop_pre_header
      _
    $region3: #{tpu_custom_call.1} parent=1 // loop_header
      %s22 = sphi 0, %s26
      %p23 = scmp.ge.s32.totalorder %s22, 4
      %s29 = sphi 0, %s41
      %s30 = sphi 0, %s37
      %s31 = sphi 0, %s29
      %s32 = sphi 0, %s30
      %s33 = sphi 0, %s31
      %s34 = sphi 0, %s32
      %s46 = sphi 0, %s48
      %s49 = sphi 0, %s46
      %s50 = sphi 0, %s49
      %s66 = sphi 0, %s50
      %s70 = sphi 0, %s70
      %s72 = sphi 0, %s70
      %s73 = sphi 0, %s72
      %s87 = sphi 0, %s73
      %s91 = sphi 0, %s91
      %s93 = sphi 0, %s91
      %s94 = sphi 0, %s93
      %s108 = sphi 0, %s94
      %s112 = sphi 0, %s112
      %s114 = sphi 0, %s112
      %s115 = sphi 0, %s114
      %s129 = sphi 0, %s115
      %s133 = sphi 0, %s133
      %s135 = sphi 0, %s133
      %s136 = sphi 0, %s135
      %s150 = sphi 0, %s136
      %s154 = sphi 0, %s154
      %s156 = sphi 0, %s154
      %s157 = sphi 0, %s156
      %s171 = sphi 0, %s157
      %s175 = sphi 0, %s175
      %s177 = sphi 0, %s175
      %s178 = sphi 0, %s177
      %s192 = sphi 0, %s178
      %s196 = sphi 0, %s196
      %s198 = sphi 0, %s196
      %s199 = sphi 0, %s198
      %s213 = sphi 0, %s199
      %s217 = sphi 0, %s217
      %s219 = sphi 0, %s217
      %s220 = sphi 0, %s219
      %s234 = sphi 0, %s220
      %s238 = sphi 0, %s238
      %s240 = sphi 0, %s238
      %s241 = sphi 0, %s240
      %s255 = sphi 0, %s241
      %s259 = sphi 0, %s259
      %s261 = sphi 0, %s259
      %s262 = sphi 0, %s261
      %s276 = sphi 0, %s262
      %s280 = sphi 0, %s280
      %s282 = sphi 0, %s280
      %s283 = sphi 0, %s282
      %s297 = sphi 0, %s283
      %s301 = sphi 0, %s301
      %s303 = sphi 0, %s301
      %s304 = sphi 0, %s303
      %s318 = sphi 0, %s304
      %s326 = sphi 0, %s328
      %s329 = sphi 0, %s326
      %s330 = sphi 0, %s329
      %s346 = sphi 0, %s330
    $region4: #{tpu_custom_call.1} parent=1 // loop_header_branch
      %25 = sbr.rel (%p23) target = $region8
    $region5: #{tpu_custom_call.1} parent=1 // loop_body
      %s27 = ssub.s32 %s22, 1
      %s28 = ssub.s32 %s22, 2
      %s35 = sadd.s32 1, %s30
      %p36 = scmp.ge.s32.totalorder %s35, 1
      %s37 = scalar_select %p36, 0, %s35
      %s38 = sadd.s32 1, %s29
      %s39 = scalar_select %p36, %s38, %s29
      %p40 = scmp.ge.s32.totalorder %s39, 2
      %s41 = scalar_select %p40, 0, %s39
      %s42 = ssub.s32 %s29, %s41
      %s43 = ssub.s32 %s30, %s37
      %s44 = sor.u32 %s42, %s43
      %p45 = scmp.eq.s32.totalorder %s44, 0
      %s47 = sadd.s32 %s46, 1
      %s48 = scalar_select %p45, %s46, %s47
      %p51 = pneg %p45
      %p52 = scmp.eq.s32.totalorder %s22, 1
      %p53 = por %p51, %p52
      %p54 = scmp.ne.s32.totalorder %s46, %s49
      %p55 = scmp.eq.s32.totalorder %s22, 0
      %p56 = por %p54, %p55
      %p57 = scmp.ne.s32.totalorder %s46, %s49
      %p58 = scmp.eq.s32.totalorder %s27, 1
      %p59 = por %p57, %p58
      %p60 = scmp.ne.s32.totalorder %s49, %s50
      %p61 = scmp.eq.s32.totalorder %s27, 0
      %p62 = por %p60, %p61
      %p63 = scmp.ne.s32.totalorder %s49, %s50
      %p64 = scmp.eq.s32.totalorder %s28, 1
      %p65 = por %p63, %p64
      %p67 = scmp.ne.s32.totalorder %s50, %s66
      %p68 = scmp.eq.s32.totalorder %s28, 0
      %p69 = por %p67, %p68
      %s71 = sadd.s32 %s70, 1
      %p74 = scmp.eq.s32.totalorder %s22, 1
      %p75 = scmp.ne.s32.totalorder %s70, %s72
      %p76 = scmp.eq.s32.totalorder %s22, 0
      %p77 = por %p75, %p76
      %p78 = scmp.ne.s32.totalorder %s70, %s72
      %p79 = scmp.eq.s32.totalorder %s27, 1
      %p80 = por %p78, %p79
      %p81 = scmp.ne.s32.totalorder %s72, %s73
      %p82 = scmp.eq.s32.totalorder %s27, 0
      %p83 = por %p81, %p82
      %p84 = scmp.ne.s32.totalorder %s72, %s73
      %p85 = scmp.eq.s32.totalorder %s28, 1
      %p86 = por %p84, %p85
      %p88 = scmp.ne.s32.totalorder %s73, %s87
      %p89 = scmp.eq.s32.totalorder %s28, 0
      %p90 = por %p88, %p89
      %s92 = sadd.s32 %s91, 1
      %p95 = scmp.eq.s32.totalorder %s22, 1
      %p96 = scmp.ne.s32.totalorder %s91, %s93
      %p97 = scmp.eq.s32.totalorder %s22, 0
      %p98 = por %p96, %p97
      %p99 = scmp.ne.s32.totalorder %s91, %s93
      %p100 = scmp.eq.s32.totalorder %s27, 1
      %p101 = por %p99, %p100
      %p102 = scmp.ne.s32.totalorder %s93, %s94
      %p103 = scmp.eq.s32.totalorder %s27, 0
      %p104 = por %p102, %p103
      %p105 = scmp.ne.s32.totalorder %s93, %s94
      %p106 = scmp.eq.s32.totalorder %s28, 1
      %p107 = por %p105, %p106
      %p109 = scmp.ne.s32.totalorder %s94, %s108
      %p110 = scmp.eq.s32.totalorder %s28, 0
      %p111 = por %p109, %p110
      %s113 = sadd.s32 %s112, 1
      %p116 = scmp.eq.s32.totalorder %s22, 1
      %p117 = scmp.ne.s32.totalorder %s112, %s114
      %p118 = scmp.eq.s32.totalorder %s22, 0
      %p119 = por %p117, %p118
      %p120 = scmp.ne.s32.totalorder %s112, %s114
      %p121 = scmp.eq.s32.totalorder %s27, 1
      %p122 = por %p120, %p121
      %p123 = scmp.ne.s32.totalorder %s114, %s115
      %p124 = scmp.eq.s32.totalorder %s27, 0
      %p125 = por %p123, %p124
      %p126 = scmp.ne.s32.totalorder %s114, %s115
      %p127 = scmp.eq.s32.totalorder %s28, 1
      %p128 = por %p126, %p127
      %p130 = scmp.ne.s32.totalorder %s115, %s129
      %p131 = scmp.eq.s32.totalorder %s28, 0
      %p132 = por %p130, %p131
      %s134 = sadd.s32 %s133, 1
      %p137 = scmp.eq.s32.totalorder %s22, 1
      %p138 = scmp.ne.s32.totalorder %s133, %s135
      %p139 = scmp.eq.s32.totalorder %s22, 0
      %p140 = por %p138, %p139
      %p141 = scmp.ne.s32.totalorder %s133, %s135
      %p142 = scmp.eq.s32.totalorder %s27, 1
      %p143 = por %p141, %p142
      %p144 = scmp.ne.s32.totalorder %s135, %s136
      %p145 = scmp.eq.s32.totalorder %s27, 0
      %p146 = por %p144, %p145
      %p147 = scmp.ne.s32.totalorder %s135, %s136
      %p148 = scmp.eq.s32.totalorder %s28, 1
      %p149 = por %p147, %p148
      %p151 = scmp.ne.s32.totalorder %s136, %s150
      %p152 = scmp.eq.s32.totalorder %s28, 0
      %p153 = por %p151, %p152
      %s155 = sadd.s32 %s154, 1
      %p158 = scmp.eq.s32.totalorder %s22, 1
      %p159 = scmp.ne.s32.totalorder %s154, %s156
      %p160 = scmp.eq.s32.totalorder %s22, 0
      %p161 = por %p159, %p160
      %p162 = scmp.ne.s32.totalorder %s154, %s156
      %p163 = scmp.eq.s32.totalorder %s27, 1
      %p164 = por %p162, %p163
      %p165 = scmp.ne.s32.totalorder %s156, %s157
      %p166 = scmp.eq.s32.totalorder %s27, 0
      %p167 = por %p165, %p166
      %p168 = scmp.ne.s32.totalorder %s156, %s157
      %p169 = scmp.eq.s32.totalorder %s28, 1
      %p170 = por %p168, %p169
      %p172 = scmp.ne.s32.totalorder %s157, %s171
      %p173 = scmp.eq.s32.totalorder %s28, 0
      %p174 = por %p172, %p173
      %s176 = sadd.s32 %s175, 1
      %p179 = scmp.eq.s32.totalorder %s22, 1
      %p180 = scmp.ne.s32.totalorder %s175, %s177
      %p181 = scmp.eq.s32.totalorder %s22, 0
      %p182 = por %p180, %p181
      %p183 = scmp.ne.s32.totalorder %s175, %s177
      %p184 = scmp.eq.s32.totalorder %s27, 1
      %p185 = por %p183, %p184
      %p186 = scmp.ne.s32.totalorder %s177, %s178
      %p187 = scmp.eq.s32.totalorder %s27, 0
      %p188 = por %p186, %p187
      %p189 = scmp.ne.s32.totalorder %s177, %s178
      %p190 = scmp.eq.s32.totalorder %s28, 1
      %p191 = por %p189, %p190
      %p193 = scmp.ne.s32.totalorder %s178, %s192
      %p194 = scmp.eq.s32.totalorder %s28, 0
      %p195 = por %p193, %p194
      %s197 = sadd.s32 %s196, 1
      %p200 = scmp.eq.s32.totalorder %s22, 1
      %p201 = scmp.ne.s32.totalorder %s196, %s198
      %p202 = scmp.eq.s32.totalorder %s22, 0
      %p203 = por %p201, %p202
      %p204 = scmp.ne.s32.totalorder %s196, %s198
      %p205 = scmp.eq.s32.totalorder %s27, 1
      %p206 = por %p204, %p205
      %p207 = scmp.ne.s32.totalorder %s198, %s199
      %p208 = scmp.eq.s32.totalorder %s27, 0
      %p209 = por %p207, %p208
      %p210 = scmp.ne.s32.totalorder %s198, %s199
      %p211 = scmp.eq.s32.totalorder %s28, 1
      %p212 = por %p210, %p211
      %p214 = scmp.ne.s32.totalorder %s199, %s213
      %p215 = scmp.eq.s32.totalorder %s28, 0
      %p216 = por %p214, %p215
      %s218 = sadd.s32 %s217, 1
      %p221 = scmp.eq.s32.totalorder %s22, 1
      %p222 = scmp.ne.s32.totalorder %s217, %s219
      %p223 = scmp.eq.s32.totalorder %s22, 0
      %p224 = por %p222, %p223
      %p225 = scmp.ne.s32.totalorder %s217, %s219
      %p226 = scmp.eq.s32.totalorder %s27, 1
      %p227 = por %p225, %p226
      %p228 = scmp.ne.s32.totalorder %s219, %s220
      %p229 = scmp.eq.s32.totalorder %s27, 0
      %p230 = por %p228, %p229
      %p231 = scmp.ne.s32.totalorder %s219, %s220
      %p232 = scmp.eq.s32.totalorder %s28, 1
      %p233 = por %p231, %p232
      %p235 = scmp.ne.s32.totalorder %s220, %s234
      %p236 = scmp.eq.s32.totalorder %s28, 0
      %p237 = por %p235, %p236
      %s239 = sadd.s32 %s238, 1
      %p242 = scmp.eq.s32.totalorder %s22, 1
      %p243 = scmp.ne.s32.totalorder %s238, %s240
      %p244 = scmp.eq.s32.totalorder %s22, 0
      %p245 = por %p243, %p244
      %p246 = scmp.ne.s32.totalorder %s238, %s240
      %p247 = scmp.eq.s32.totalorder %s27, 1
      %p248 = por %p246, %p247
      %p249 = scmp.ne.s32.totalorder %s240, %s241
      %p250 = scmp.eq.s32.totalorder %s27, 0
      %p251 = por %p249, %p250
      %p252 = scmp.ne.s32.totalorder %s240, %s241
      %p253 = scmp.eq.s32.totalorder %s28, 1
      %p254 = por %p252, %p253
      %p256 = scmp.ne.s32.totalorder %s241, %s255
      %p257 = scmp.eq.s32.totalorder %s28, 0
      %p258 = por %p256, %p257
      %s260 = sadd.s32 %s259, 1
      %p263 = scmp.eq.s32.totalorder %s22, 1
      %p264 = scmp.ne.s32.totalorder %s259, %s261
      %p265 = scmp.eq.s32.totalorder %s22, 0
      %p266 = por %p264, %p265
      %p267 = scmp.ne.s32.totalorder %s259, %s261
      %p268 = scmp.eq.s32.totalorder %s27, 1
      %p269 = por %p267, %p268
      %p270 = scmp.ne.s32.totalorder %s261, %s262
      %p271 = scmp.eq.s32.totalorder %s27, 0
      %p272 = por %p270, %p271
      %p273 = scmp.ne.s32.totalorder %s261, %s262
      %p274 = scmp.eq.s32.totalorder %s28, 1
      %p275 = por %p273, %p274
      %p277 = scmp.ne.s32.totalorder %s262, %s276
      %p278 = scmp.eq.s32.totalorder %s28, 0
      %p279 = por %p277, %p278
      %s281 = sadd.s32 %s280, 1
      %p284 = scmp.eq.s32.totalorder %s22, 1
      %p285 = scmp.ne.s32.totalorder %s280, %s282
      %p286 = scmp.eq.s32.totalorder %s22, 0
      %p287 = por %p285, %p286
      %p288 = scmp.ne.s32.totalorder %s280, %s282
      %p289 = scmp.eq.s32.totalorder %s27, 1
      %p290 = por %p288, %p289
      %p291 = scmp.ne.s32.totalorder %s282, %s283
      %p292 = scmp.eq.s32.totalorder %s27, 0
      %p293 = por %p291, %p292
      %p294 = scmp.ne.s32.totalorder %s282, %s283
      %p295 = scmp.eq.s32.totalorder %s28, 1
      %p296 = por %p294, %p295
      %p298 = scmp.ne.s32.totalorder %s283, %s297
      %p299 = scmp.eq.s32.totalorder %s28, 0
      %p300 = por %p298, %p299
      %s302 = sadd.s32 %s301, 1
      %p305 = scmp.eq.s32.totalorder %s22, 1
      %p306 = scmp.ne.s32.totalorder %s301, %s303
      %p307 = scmp.eq.s32.totalorder %s22, 0
      %p308 = por %p306, %p307
      %p309 = scmp.ne.s32.totalorder %s301, %s303
      %p310 = scmp.eq.s32.totalorder %s27, 1
      %p311 = por %p309, %p310
      %p312 = scmp.ne.s32.totalorder %s303, %s304
      %p313 = scmp.eq.s32.totalorder %s27, 0
      %p314 = por %p312, %p313
      %p315 = scmp.ne.s32.totalorder %s303, %s304
      %p316 = scmp.eq.s32.totalorder %s28, 1
      %p317 = por %p315, %p316
      %p319 = scmp.ne.s32.totalorder %s304, %s318
      %p320 = scmp.eq.s32.totalorder %s28, 0
      %p321 = por %p319, %p320
      %s322 = ssub.s32 %s29, %s41
      %s323 = ssub.s32 %s30, %s37
      %s324 = sor.u32 %s322, %s323
      %p325 = scmp.eq.s32.totalorder %s324, 0
      %s327 = sadd.s32 %s326, 1
      %s328 = scalar_select %p325, %s326, %s327
      %p331 = pneg %p325
      %p332 = scmp.eq.s32.totalorder %s22, 1
      %p333 = por %p331, %p332
      %p334 = scmp.ne.s32.totalorder %s326, %s329
      %p335 = scmp.eq.s32.totalorder %s22, 0
      %p336 = por %p334, %p335
      %p337 = scmp.ne.s32.totalorder %s326, %s329
      %p338 = scmp.eq.s32.totalorder %s27, 1
      %p339 = por %p337, %p338
      %p340 = scmp.ne.s32.totalorder %s329, %s330
      %p341 = scmp.eq.s32.totalorder %s27, 0
      %p342 = por %p340, %p341
      %p343 = scmp.ne.s32.totalorder %s329, %s330
      %p344 = scmp.eq.s32.totalorder %s28, 1
      %p345 = por %p343, %p344
      %p347 = scmp.ne.s32.totalorder %s330, %s346
      %p348 = scmp.eq.s32.totalorder %s28, 0
      %p349 = por %p347, %p348
      %p350 = scmp.le.s32.totalorder 1, %s22
      %p351 = scmp.lt.s32.totalorder %s22, 3
      %p352 = pnand %p350, %p351
      %p353 = pneg %p352
      // Predicated region
      $region9: #{tpu_custom_call.1} parent=5 // pred_check
        _
      $region10: #{tpu_custom_call.1} parent=5 // pred_check_branch
        %355 = sbr.rel (%p352) target = $region12
      $region11: #{tpu_custom_call.1} parent=5 // pred_region
        %s356 = ssub.s32 %s22, 1
        // Predicated region
        $region13: #{tpu_custom_call.1} parent=11 // pred_check
          %p357 = pneg %p83
        $region14: #{tpu_custom_call.1} parent=11 // pred_check_branch
          %359 = sbr.rel (%p357) target = $region16
        $region15: #{tpu_custom_call.1} parent=11 // pred_region
          _
        $region16: #{tpu_custom_call.1} parent=11 // pred_fallthru
          _
        // Predicated region
        $region17: #{tpu_custom_call.1} parent=11 // pred_check
          %p360 = pneg %p104
        $region18: #{tpu_custom_call.1} parent=11 // pred_check_branch
          %362 = sbr.rel (%p360) target = $region20
        $region19: #{tpu_custom_call.1} parent=11 // pred_region
          _
        $region20: #{tpu_custom_call.1} parent=11 // pred_fallthru
          _
        // Predicated region
        $region21: #{tpu_custom_call.1} parent=11 // pred_check
          %p363 = pneg %p125
        $region22: #{tpu_custom_call.1} parent=11 // pred_check_branch
          %365 = sbr.rel (%p363) target = $region24
        $region23: #{tpu_custom_call.1} parent=11 // pred_region
          _
        $region24: #{tpu_custom_call.1} parent=11 // pred_fallthru
          _
        // Predicated region
        $region25: #{tpu_custom_call.1} parent=11 // pred_check
          %p366 = pneg %p146
        $region26: #{tpu_custom_call.1} parent=11 // pred_check_branch
          %368 = sbr.rel (%p366) target = $region28
        $region27: #{tpu_custom_call.1} parent=11 // pred_region
          _
        $region28: #{tpu_custom_call.1} parent=11 // pred_fallthru
          _
        // Predicated region
        $region29: #{tpu_custom_call.1} parent=11 // pred_check
          %p369 = pneg %p167
        $region30: #{tpu_custom_call.1} parent=11 // pred_check_branch
          %371 = sbr.rel (%p369) target = $region32
        $region31: #{tpu_custom_call.1} parent=11 // pred_region
          _
        $region32: #{tpu_custom_call.1} parent=11 // pred_fallthru
          _
        // Predicated region
        $region33: #{tpu_custom_call.1} parent=11 // pred_check
          %p372 = pneg %p188
        $region34: #{tpu_custom_call.1} parent=11 // pred_check_branch
          %374 = sbr.rel (%p372) target = $region36
        $region35: #{tpu_custom_call.1} parent=11 // pred_region
          _
        $region36: #{tpu_custom_call.1} parent=11 // pred_fallthru
          _
        // Predicated region
        $region37: #{tpu_custom_call.1} parent=11 // pred_check
          %p375 = pneg %p209
        $region38: #{tpu_custom_call.1} parent=11 // pred_check_branch
          %377 = sbr.rel (%p375) target = $region40
        $region39: #{tpu_custom_call.1} parent=11 // pred_region
          _
        $region40: #{tpu_custom_call.1} parent=11 // pred_fallthru
          _
        // Predicated region
        $region41: #{tpu_custom_call.1} parent=11 // pred_check
          %p378 = pneg %p230
        $region42: #{tpu_custom_call.1} parent=11 // pred_check_branch
          %380 = sbr.rel (%p378) target = $region44
        $region43: #{tpu_custom_call.1} parent=11 // pred_region
          _
        $region44: #{tpu_custom_call.1} parent=11 // pred_fallthru
          _
        // Predicated region
        $region45: #{tpu_custom_call.1} parent=11 // pred_check
          %p381 = pneg %p251
        $region46: #{tpu_custom_call.1} parent=11 // pred_check_branch
          %383 = sbr.rel (%p381) target = $region48
        $region47: #{tpu_custom_call.1} parent=11 // pred_region
          _
        $region48: #{tpu_custom_call.1} parent=11 // pred_fallthru
          _
        // Predicated region
        $region49: #{tpu_custom_call.1} parent=11 // pred_check
          %p384 = pneg %p272
        $region50: #{tpu_custom_call.1} parent=11 // pred_check_branch
          %386 = sbr.rel (%p384) target = $region52
        $region51: #{tpu_custom_call.1} parent=11 // pred_region
          _
        $region52: #{tpu_custom_call.1} parent=11 // pred_fallthru
          _
        // Predicated region
        $region53: #{tpu_custom_call.1} parent=11 // pred_check
          %p387 = pneg %p293
        $region54: #{tpu_custom_call.1} parent=11 // pred_check_branch
          %389 = sbr.rel (%p387) target = $region56
        $region55: #{tpu_custom_call.1} parent=11 // pred_region
          _
        $region56: #{tpu_custom_call.1} parent=11 // pred_fallthru
          _
        // Predicated region
        $region57: #{tpu_custom_call.1} parent=11 // pred_check
          %p390 = pneg %p314
        $region58: #{tpu_custom_call.1} parent=11 // pred_check_branch
          %392 = sbr.rel (%p390) target = $region60
        $region59: #{tpu_custom_call.1} parent=11 // pred_region
          _
        $region60: #{tpu_custom_call.1} parent=11 // pred_fallthru
          _
      $region12: #{tpu_custom_call.1} parent=5 // pred_fallthru
        _
      %p393 = scmp.lt.s32.totalorder %s22, 2
      // Predicated region
      $region61: #{tpu_custom_call.1} parent=5 // pred_check
        %p394 = pneg %p393
      $region62: #{tpu_custom_call.1} parent=5 // pred_check_branch
        %396 = sbr.rel (%p394) target = $region64
      $region63: #{tpu_custom_call.1} parent=5 // pred_region
        // Predicated region
        $region65: #{tpu_custom_call.1} parent=63 // pred_check
          %p397 = pneg %p56
        $region66: #{tpu_custom_call.1} parent=63 // pred_check_branch
          %399 = sbr.rel (%p397) target = $region68
        $region67: #{tpu_custom_call.1} parent=63 // pred_region
          %p400 = scmp.lt.s32.totalorder %s29, 1
          %s401 = scalar_select %p400, %s29, 1
          %p402 = scmp.lt.s32.totalorder %s30, 0
          %s403 = scalar_select %p402, %s30, 0
          %s404 = sadd.s32 %s403, %s401
          %s405 = smul.addr %s404, 8
          %s406 = scalar_lea.vmem %s0, %s405
        $region68: #{tpu_custom_call.1} parent=63 // pred_fallthru
          _
      $region64: #{tpu_custom_call.1} parent=5 // pred_fallthru
        _
      %p407 = scmp.le.s32.totalorder 1, %s22
      %p408 = scmp.lt.s32.totalorder %s22, 3
      %p409 = pnand %p407, %p408
      %p410 = pneg %p409
      // Predicated region
      $region69: #{tpu_custom_call.1} parent=5 // pred_check
        _
      $region70: #{tpu_custom_call.1} parent=5 // pred_check_branch
        %412 = sbr.rel (%p409) target = $region72
      $region71: #{tpu_custom_call.1} parent=5 // pred_region
        %s413 = ssub.s32 %s22, 1
        %p414 = scmp.lt.s32.totalorder %s31, 1
        %s415 = scalar_select %p414, %s31, 1
        %p416 = scmp.lt.s32.totalorder %s32, 0
        %s417 = scalar_select %p416, %s32, 0
        %s418 = sadd.s32 %s417, %s415
        %s419 = smul.addr %s418, 8
        %s420 = scalar_lea.vmem %s0, %s419
        %p421 = pneg %p62
        %p422 = pneg %p59
        %p423 = pneg %p83
        %p424 = pneg %p80
        %p425 = pneg %p104
        %p426 = pneg %p101
        %p427 = pneg %p125
        %p428 = pneg %p122
        %p429 = pneg %p146
        %p430 = pneg %p143
        %p431 = pneg %p167
        %p432 = pneg %p164
        %p433 = pneg %p188
        %p434 = pneg %p185
        %p435 = pneg %p209
        %p436 = pneg %p206
        %p437 = pneg %p230
        %p438 = pneg %p227
        %p439 = pneg %p251
        %p440 = pneg %p248
        %p441 = pneg %p272
        %p442 = pneg %p269
        %p443 = pneg %p293
        %p444 = pneg %p290
        %p445 = pneg %p314
        %p446 = pneg %p311
        %p447 = pneg %p342
        %p448 = pneg %p339
        %s449 = sand.u32 %s329, 1
        %s450 = scalar_lea.sflag [#allocation3], %s449
        %s451 = sand.u32 %s329, 1
        %s452 = smul.addr %s451, 8
        %s453 = scalar_lea.vmem [#allocation2], %s452
        %p454 = scmp.lt.s32.totalorder %s31, 1
        %s455 = scalar_select %p454, %s31, 1
        %p456 = scmp.lt.s32.totalorder %s32, 0
        %s457 = scalar_select %p456, %s32, 0
        %s458 = sadd.s32 %s457, %s455
        %s459 = smul.addr %s458, 8
        %s460 = scalar_lea.vmem %s0, %s459
        %v462 = vld [vmem:[%s460] sm:$0xff]
        %v463 = vpack.c.bf16 %v462, %v462
        %v464 = vld [vmem:[%s1] sm:$0xf]
        %v465 = vld [vmem:[%s1 + $0x4] sm:$0xf]
        %v466 = vld [vmem:[%s1 + $0x8] sm:$0xf]
        %v467 = vld [vmem:[%s1 + $0xc] sm:$0xf]
        %v472 = vunpack.c.l.b16 %v464
        %v473 = vunpack.c.l.b16 %v465
        %v474 = vunpack.c.l.b16 %v466
        %v475 = vunpack.c.l.b16 %v467
        %v476 = vpack.c.b16 %v473, %v472
        %v477 = vpack.c.b16 %v475, %v474
        %vm480 = vcmask 261120
        %v482 = vsel %vm480, %v463, 0
        %484 = vmatprep.subr.bf16.mxu0 0
        %485 = vmatpush1.bf16.msra.mxu0 %v476
        %486 = vmatprep.subr.bf16.mxu0 0
        %487 = vmatpush1.bf16.msra.mxu0 %v477
        %488 = vmatprep.subr.bf16.mxu0 0
        %489 = vmatpush1.bf16.msra.mxu0 0
        %490 = vmatprep.subr.bf16.mxu0 0
        %491 = vmatpush1.bf16.msra.mxu0 0
        %492 = vmatprep.subr.bf16.mxu0 0
        %493 = vmatpush1.bf16.msra.mxu0 0
        %494 = vmatprep.subr.bf16.mxu0 0
        %495 = vmatpush1.bf16.msra.mxu0 0
        %496 = vmatprep.subr.bf16.mxu0 0
        %497 = vmatpush1.bf16.msra.mxu0 0
        %498 = vmatprep.subr.bf16.mxu0 0
        %499 = vmatpush1.bf16.msra.mxu0 0
        %500 = vmatprep.subr.bf16.mxu0 0
        %501 = vmatpush1.bf16.msra.mxu0 0
        %502 = vmatprep.subr.bf16.mxu0 0
        %503 = vmatpush1.bf16.msra.mxu0 0
        %504 = vmatprep.subr.bf16.mxu0 0
        %505 = vmatpush1.bf16.msra.mxu0 0
        %506 = vmatprep.subr.bf16.mxu0 0
        %507 = vmatpush1.bf16.msra.mxu0 0
        %508 = vmatprep.subr.bf16.mxu0 0
        %509 = vmatpush1.bf16.msra.mxu0 0
        %510 = vmatprep.subr.bf16.mxu0 0
        %511 = vmatpush1.bf16.msra.mxu0 0
        %512 = vmatprep.subr.bf16.mxu0 0
        %513 = vmatpush1.bf16.msra.mxu0 0
        %514 = vmatprep.subr.bf16.mxu0 0
        %515 = vmatpush1.bf16.msra.mxu0 0
        %516 = vmatprep.mubr.bf16.mxu0 0
        %517 = vmatmul.mubr.bf16.gmra.mrb[0].mxu0 %v482
        %v518 = vpop.f32.mrb[0].mxu0
        %v519 = vadd.f32 0.0, %v518
        %v520 = vpop.f32.mrb[0].mxu0
        %v521 = vpop.f32.mrb[0].mxu0
        %v522 = vpop.f32.mrb[0].mxu0
        %523 = vdwg.mxu0
        %v524 = vld [vmem:[%s2] sm:$0xf]
        %v525 = vld [vmem:[%s2 + $0x4] sm:$0xf]
        %v526 = vld [vmem:[%s2 + $0x8] sm:$0xf]
        %v527 = vld [vmem:[%s2 + $0xc] sm:$0xf]
        %v532 = vunpack.c.l.b16 %v524
        %v533 = vunpack.c.l.b16 %v525
        %v534 = vunpack.c.l.b16 %v526
        %v535 = vunpack.c.l.b16 %v527
        %v536 = vpack.c.b16 %v533, %v532
        %v537 = vpack.c.b16 %v535, %v534
        %540 = vmatprep.subr.bf16.mxu0 0
        %541 = vmatpush1.bf16.msra.mxu0 %v536
        %542 = vmatprep.subr.bf16.mxu0 0
        %543 = vmatpush1.bf16.msra.mxu0 %v537
        %544 = vmatprep.subr.bf16.mxu0 0
        %545 = vmatpush1.bf16.msra.mxu0 0
        %546 = vmatprep.subr.bf16.mxu0 0
        %547 = vmatpush1.bf16.msra.mxu0 0
        %548 = vmatprep.subr.bf16.mxu0 0
        %549 = vmatpush1.bf16.msra.mxu0 0
        %550 = vmatprep.subr.bf16.mxu0 0
        %551 = vmatpush1.bf16.msra.mxu0 0
        %552 = vmatprep.subr.bf16.mxu0 0
        %553 = vmatpush1.bf16.msra.mxu0 0
        %554 = vmatprep.subr.bf16.mxu0 0
        %555 = vmatpush1.bf16.msra.mxu0 0
        %556 = vmatprep.subr.bf16.mxu0 0
        %557 = vmatpush1.bf16.msra.mxu0 0
        %558 = vmatprep.subr.bf16.mxu0 0
        %559 = vmatpush1.bf16.msra.mxu0 0
        %560 = vmatprep.subr.bf16.mxu0 0
        %561 = vmatpush1.bf16.msra.mxu0 0
        %562 = vmatprep.subr.bf16.mxu0 0
        %563 = vmatpush1.bf16.msra.mxu0 0
        %564 = vmatprep.subr.bf16.mxu0 0
        %565 = vmatpush1.bf16.msra.mxu0 0
        %566 = vmatprep.subr.bf16.mxu0 0
        %567 = vmatpush1.bf16.msra.mxu0 0
        %568 = vmatprep.subr.bf16.mxu0 0
        %569 = vmatpush1.bf16.msra.mxu0 0
        %570 = vmatprep.subr.bf16.mxu0 0
        %571 = vmatpush1.bf16.msra.mxu0 0
        %572 = vmatprep.mubr.bf16.mxu0 0
        %573 = vmatmul.mubr.bf16.gmra.mrb[0].mxu0 %v482
        %v574 = vpop.f32.mrb[0].mxu0
        %v575 = vadd.f32 0.0, %v574
        %v576 = vpop.f32.mrb[0].mxu0
        %v577 = vpop.f32.mrb[0].mxu0
        %v578 = vpop.f32.mrb[0].mxu0
        %579 = vdwg.mxu0
        %v580 = vld [vmem:[%s3] sm:$0xf]
        %v581 = vld [vmem:[%s3 + $0x4] sm:$0xf]
        %v582 = vld [vmem:[%s3 + $0x8] sm:$0xf]
        %v583 = vld [vmem:[%s3 + $0xc] sm:$0xf]
        %v588 = vunpack.c.l.b16 %v580
        %v589 = vunpack.c.l.b16 %v581
        %v590 = vunpack.c.l.b16 %v582
        %v591 = vunpack.c.l.b16 %v583
        %v592 = vpack.c.b16 %v589, %v588
        %v593 = vpack.c.b16 %v591, %v590
        %596 = vmatprep.subr.bf16.mxu0 0
        %597 = vmatpush1.bf16.msra.mxu0 %v592
        %598 = vmatprep.subr.bf16.mxu0 0
        %599 = vmatpush1.bf16.msra.mxu0 %v593
        %600 = vmatprep.subr.bf16.mxu0 0
        %601 = vmatpush1.bf16.msra.mxu0 0
        %602 = vmatprep.subr.bf16.mxu0 0
        %603 = vmatpush1.bf16.msra.mxu0 0
        %604 = vmatprep.subr.bf16.mxu0 0
        %605 = vmatpush1.bf16.msra.mxu0 0
        %606 = vmatprep.subr.bf16.mxu0 0
        %607 = vmatpush1.bf16.msra.mxu0 0
        %608 = vmatprep.subr.bf16.mxu0 0
        %609 = vmatpush1.bf16.msra.mxu0 0
        %610 = vmatprep.subr.bf16.mxu0 0
        %611 = vmatpush1.bf16.msra.mxu0 0
        %612 = vmatprep.subr.bf16.mxu0 0
        %613 = vmatpush1.bf16.msra.mxu0 0
        %614 = vmatprep.subr.bf16.mxu0 0
        %615 = vmatpush1.bf16.msra.mxu0 0
        %616 = vmatprep.subr.bf16.mxu0 0
        %617 = vmatpush1.bf16.msra.mxu0 0
        %618 = vmatprep.subr.bf16.mxu0 0
        %619 = vmatpush1.bf16.msra.mxu0 0
        %620 = vmatprep.subr.bf16.mxu0 0
        %621 = vmatpush1.bf16.msra.mxu0 0
        %622 = vmatprep.subr.bf16.mxu0 0
        %623 = vmatpush1.bf16.msra.mxu0 0
        %624 = vmatprep.subr.bf16.mxu0 0
        %625 = vmatpush1.bf16.msra.mxu0 0
        %626 = vmatprep.subr.bf16.mxu0 0
        %627 = vmatpush1.bf16.msra.mxu0 0
        %628 = vmatprep.mubr.bf16.mxu0 0
        %629 = vmatmul.mubr.bf16.gmra.mrb[0].mxu0 %v482
        %v630 = vpop.f32.mrb[0].mxu0
        %v631 = vadd.f32 0.0, %v630
        %v632 = vpop.f32.mrb[0].mxu0
        %v633 = vpop.f32.mrb[0].mxu0
        %v634 = vpop.f32.mrb[0].mxu0
        %635 = vdwg.mxu0
        %v636 = vpack.c.bf16 %v519, %v519
        %v637 = vpack.c.bf16 %v575, %v575
        %vm638 = vcmask 64512
        %v640 = vsel %vm638, %v636, 0
        %v643 = vsel %vm638, %v637, 0
        %645 = vmatprep.subr.bf16.mxu0 0
        %646 = vmatpush1.bf16.xpose.msra.mxu0 %v643
        %647 = vmatprep.subr.bf16.mxu0 0
        %648 = vmatpush1.bf16.xpose.msra.mxu0 0
        %649 = vmatprep.subr.bf16.mxu0 0
        %650 = vmatpush1.bf16.xpose.msra.mxu0 0
        %651 = vmatprep.subr.bf16.mxu0 0
        %652 = vmatpush1.bf16.xpose.msra.mxu0 0
        %653 = vmatprep.subr.bf16.mxu0 0
        %654 = vmatpush1.bf16.xpose.msra.mxu0 0
        %655 = vmatprep.subr.bf16.mxu0 0
        %656 = vmatpush1.bf16.xpose.msra.mxu0 0
        %657 = vmatprep.subr.bf16.mxu0 0
        %658 = vmatpush1.bf16.xpose.msra.mxu0 0
        %659 = vmatprep.subr.bf16.mxu0 0
        %660 = vmatpush1.bf16.xpose.msra.mxu0 0
        %661 = vmatprep.subr.bf16.mxu0 0
        %662 = vmatpush1.bf16.xpose.msra.mxu0 0
        %663 = vmatprep.subr.bf16.mxu0 0
        %664 = vmatpush1.bf16.xpose.msra.mxu0 0
        %665 = vmatprep.subr.bf16.mxu0 0
        %666 = vmatpush1.bf16.xpose.msra.mxu0 0
        %667 = vmatprep.subr.bf16.mxu0 0
        %668 = vmatpush1.bf16.xpose.msra.mxu0 0
        %669 = vmatprep.subr.bf16.mxu0 0
        %670 = vmatpush1.bf16.xpose.msra.mxu0 0
        %671 = vmatprep.subr.bf16.mxu0 0
        %672 = vmatpush1.bf16.xpose.msra.mxu0 0
        %673 = vmatprep.subr.bf16.mxu0 0
        %674 = vmatpush1.bf16.xpose.msra.mxu0 0
        %675 = vmatprep.subr.bf16.mxu0 0
        %676 = vmatpush1.bf16.xpose.msra.mxu0 0
        %677 = vmatprep.mubr.bf16.mxu0 0
        %678 = vmatmul.mubr.bf16.gmra.mrb[0].mxu0 %v640
        %v679 = vpop.f32.mrb[0].mxu0
        %v680 = vadd.f32 0.0, %v679
        %v681 = vpop.f32.mrb[0].mxu0
        %v682 = vpop.f32.mrb[0].mxu0
        %v683 = vpop.f32.mrb[0].mxu0
        %684 = vdwg.mxu0
        %v685 = vsel %vm638, %v680, -inf
        %686 = vmax.xlane.f32.xlu0 %v685
        %v687 = vpop.xlane.xlu0 %686
        %v688 = vsub.f32 %v680, %v687
        %v689 = vmul.f32 %v688, 1.442695
        %v690 = vpow.pop %v689
        %v691 = vsel %vm638, %v690, 0.0
        %692 = vadd.xlane.f32.xlu0 %v691
        %v693 = vpop.xlane.xlu0 %692
        %v694 = vrcp.pop %v693
        %v695 = vmul.f32 %v690, %v694
        %vm696 = vcmp.ne.f32.partialorder %v693, %v693
        %vm697 = vcmp.eq.f32.partialorder %v693, 0.0
        %vm698 = vmor %vm696, %vm697
        %v699 = vsel %vm698, 1, 0
        %vm700 = vcmp.eq.s32.totalorder %v699, 1
        %v701 = vsel %vm700, 0.0, %v695
        %v702 = vpack.c.bf16 %v701, %v701
        %v703 = vpack.c.bf16 %v631, %v631
        %v705 = vsel %vm638, %v702, 0
        %vm707 = vcmask 1043456
        %v709 = vsel %vm707, %v703, 0
        %711 = vmatprep.subr.bf16.mxu0 0
        %712 = vmatpush1.bf16.msra.mxu0 %v709
        %713 = vmatprep.subr.bf16.mxu0 0
        %714 = vmatpush1.bf16.msra.mxu0 0
        %715 = vmatprep.subr.bf16.mxu0 0
        %716 = vmatpush1.bf16.msra.mxu0 0
        %717 = vmatprep.subr.bf16.mxu0 0
        %718 = vmatpush1.bf16.msra.mxu0 0
        %719 = vmatprep.subr.bf16.mxu0 0
        %720 = vmatpush1.bf16.msra.mxu0 0
        %721 = vmatprep.subr.bf16.mxu0 0
        %722 = vmatpush1.bf16.msra.mxu0 0
        %723 = vmatprep.subr.bf16.mxu0 0
        %724 = vmatpush1.bf16.msra.mxu0 0
        %725 = vmatprep.subr.bf16.mxu0 0
        %726 = vmatpush1.bf16.msra.mxu0 0
        %727 = vmatprep.subr.bf16.mxu0 0
        %728 = vmatpush1.bf16.msra.mxu0 0
        %729 = vmatprep.subr.bf16.mxu0 0
        %730 = vmatpush1.bf16.msra.mxu0 0
        %731 = vmatprep.subr.bf16.mxu0 0
        %732 = vmatpush1.bf16.msra.mxu0 0
        %733 = vmatprep.subr.bf16.mxu0 0
        %734 = vmatpush1.bf16.msra.mxu0 0
        %735 = vmatprep.subr.bf16.mxu0 0
        %736 = vmatpush1.bf16.msra.mxu0 0
        %737 = vmatprep.subr.bf16.mxu0 0
        %738 = vmatpush1.bf16.msra.mxu0 0
        %739 = vmatprep.subr.bf16.mxu0 0
        %740 = vmatpush1.bf16.msra.mxu0 0
        %741 = vmatprep.subr.bf16.mxu0 0
        %742 = vmatpush1.bf16.msra.mxu0 0
        %743 = vmatprep.mubr.bf16.mxu0 0
        %744 = vmatmul.mubr.bf16.gmra.mrb[0].mxu0 %v705
        %v745 = vpop.f32.mrb[0].mxu0
        %v746 = vadd.f32 0.0, %v745
        %v747 = vpop.f32.mrb[0].mxu0
        %v748 = vpop.f32.mrb[0].mxu0
        %v749 = vpop.f32.mrb[0].mxu0
        %750 = vdwg.mxu0
        %v751 = vpack.c.bf16 %v746, %v746
        %v752 = vld [vmem:[%s4] sm:$0xf]
        %s753 = scalar_lea.vmem %s1, 16
        %v754 = vld [vmem:[%s753] sm:$0xf]
        %v755 = vld [vmem:[%s753 + $0x4] sm:$0xf]
        %v756 = vld [vmem:[%s753 + $0x8] sm:$0xf]
        %v757 = vld [vmem:[%s753 + $0xc] sm:$0xf]
        %v762 = vunpack.c.l.b16 %v754
        %v763 = vunpack.c.l.b16 %v755
        %v764 = vunpack.c.l.b16 %v756
        %v765 = vunpack.c.l.b16 %v757
        %v766 = vpack.c.b16 %v763, %v762
        %v767 = vpack.c.b16 %v765, %v764
        %770 = vmatprep.subr.bf16.mxu0 0
        %771 = vmatpush1.bf16.msra.mxu0 %v766
        %772 = vmatprep.subr.bf16.mxu0 0
        %773 = vmatpush1.bf16.msra.mxu0 %v767
        %774 = vmatprep.subr.bf16.mxu0 0
        %775 = vmatpush1.bf16.msra.mxu0 0
        %776 = vmatprep.subr.bf16.mxu0 0
        %777 = vmatpush1.bf16.msra.mxu0 0
        %778 = vmatprep.subr.bf16.mxu0 0
        %779 = vmatpush1.bf16.msra.mxu0 0
        %780 = vmatprep.subr.bf16.mxu0 0
        %781 = vmatpush1.bf16.msra.mxu0 0
        %782 = vmatprep.subr.bf16.mxu0 0
        %783 = vmatpush1.bf16.msra.mxu0 0
        %784 = vmatprep.subr.bf16.mxu0 0
        %785 = vmatpush1.bf16.msra.mxu0 0
        %786 = vmatprep.subr.bf16.mxu0 0
        %787 = vmatpush1.bf16.msra.mxu0 0
        %788 = vmatprep.subr.bf16.mxu0 0
        %789 = vmatpush1.bf16.msra.mxu0 0
        %790 = vmatprep.subr.bf16.mxu0 0
        %791 = vmatpush1.bf16.msra.mxu0 0
        %792 = vmatprep.subr.bf16.mxu0 0
        %793 = vmatpush1.bf16.msra.mxu0 0
        %794 = vmatprep.subr.bf16.mxu0 0
        %795 = vmatpush1.bf16.msra.mxu0 0
        %796 = vmatprep.subr.bf16.mxu0 0
        %797 = vmatpush1.bf16.msra.mxu0 0
        %798 = vmatprep.subr.bf16.mxu0 0
        %799 = vmatpush1.bf16.msra.mxu0 0
        %800 = vmatprep.subr.bf16.mxu0 0
        %801 = vmatpush1.bf16.msra.mxu0 0
        %802 = vmatprep.mubr.bf16.mxu0 0
        %803 = vmatmul.mubr.bf16.gmra.mrb[0].mxu0 %v482
        %v804 = vpop.f32.mrb[0].mxu0
        %v805 = vadd.f32 0.0, %v804
        %v806 = vpop.f32.mrb[0].mxu0
        %v807 = vpop.f32.mrb[0].mxu0
        %v808 = vpop.f32.mrb[0].mxu0
        %809 = vdwg.mxu0
        %s810 = scalar_lea.vmem %s2, 16
        %v811 = vld [vmem:[%s810] sm:$0xf]
        %v812 = vld [vmem:[%s810 + $0x4] sm:$0xf]
        %v813 = vld [vmem:[%s810 + $0x8] sm:$0xf]
        %v814 = vld [vmem:[%s810 + $0xc] sm:$0xf]
        %v819 = vunpack.c.l.b16 %v811
        %v820 = vunpack.c.l.b16 %v812
        %v821 = vunpack.c.l.b16 %v813
        %v822 = vunpack.c.l.b16 %v814
        %v823 = vpack.c.b16 %v820, %v819
        %v824 = vpack.c.b16 %v822, %v821
        %827 = vmatprep.subr.bf16.mxu0 0
        %828 = vmatpush1.bf16.msra.mxu0 %v823
        %829 = vmatprep.subr.bf16.mxu0 0
        %830 = vmatpush1.bf16.msra.mxu0 %v824
        %831 = vmatprep.subr.bf16.mxu0 0
        %832 = vmatpush1.bf16.msra.mxu0 0
        %833 = vmatprep.subr.bf16.mxu0 0
        %834 = vmatpush1.bf16.msra.mxu0 0
        %835 = vmatprep.subr.bf16.mxu0 0
        %836 = vmatpush1.bf16.msra.mxu0 0
        %837 = vmatprep.subr.bf16.mxu0 0
        %838 = vmatpush1.bf16.msra.mxu0 0
        %839 = vmatprep.subr.bf16.mxu0 0
        %840 = vmatpush1.bf16.msra.mxu0 0
        %841 = vmatprep.subr.bf16.mxu0 0
        %842 = vmatpush1.bf16.msra.mxu0 0
        %843 = vmatprep.subr.bf16.mxu0 0
        %844 = vmatpush1.bf16.msra.mxu0 0
        %845 = vmatprep.subr.bf16.mxu0 0
        %846 = vmatpush1.bf16.msra.mxu0 0
        %847 = vmatprep.subr.bf16.mxu0 0
        %848 = vmatpush1.bf16.msra.mxu0 0
        %849 = vmatprep.subr.bf16.mxu0 0
        %850 = vmatpush1.bf16.msra.mxu0 0
        %851 = vmatprep.subr.bf16.mxu0 0
        %852 = vmatpush1.bf16.msra.mxu0 0
        %853 = vmatprep.subr.bf16.mxu0 0
        %854 = vmatpush1.bf16.msra.mxu0 0
        %855 = vmatprep.subr.bf16.mxu0 0
        %856 = vmatpush1.bf16.msra.mxu0 0
        %857 = vmatprep.subr.bf16.mxu0 0
        %858 = vmatpush1.bf16.msra.mxu0 0
        %859 = vmatprep.mubr.bf16.mxu0 0
        %860 = vmatmul.mubr.bf16.gmra.mrb[0].mxu0 %v482
        %v861 = vpop.f32.mrb[0].mxu0
        %v862 = vadd.f32 0.0, %v861
        %v863 = vpop.f32.mrb[0].mxu0
        %v864 = vpop.f32.mrb[0].mxu0
        %v865 = vpop.f32.mrb[0].mxu0
        %866 = vdwg.mxu0
        %s867 = scalar_lea.vmem %s3, 16
        %v868 = vld [vmem:[%s867] sm:$0xf]
        %v869 = vld [vmem:[%s867 + $0x4] sm:$0xf]
        %v870 = vld [vmem:[%s867 + $0x8] sm:$0xf]
        %v871 = vld [vmem:[%s867 + $0xc] sm:$0xf]
        %v876 = vunpack.c.l.b16 %v868
        %v877 = vunpack.c.l.b16 %v869
        %v878 = vunpack.c.l.b16 %v870
        %v879 = vunpack.c.l.b16 %v871
        %v880 = vpack.c.b16 %v877, %v876
        %v881 = vpack.c.b16 %v879, %v878
        %884 = vmatprep.subr.bf16.mxu0 0
        %885 = vmatpush1.bf16.msra.mxu0 %v880
        %886 = vmatprep.subr.bf16.mxu0 0
        %887 = vmatpush1.bf16.msra.mxu0 %v881
        %888 = vmatprep.subr.bf16.mxu0 0
        %889 = vmatpush1.bf16.msra.mxu0 0
        %890 = vmatprep.subr.bf16.mxu0 0
        %891 = vmatpush1.bf16.msra.mxu0 0
        %892 = vmatprep.subr.bf16.mxu0 0
        %893 = vmatpush1.bf16.msra.mxu0 0
        %894 = vmatprep.subr.bf16.mxu0 0
        %895 = vmatpush1.bf16.msra.mxu0 0
        %896 = vmatprep.subr.bf16.mxu0 0
        %897 = vmatpush1.bf16.msra.mxu0 0
        %898 = vmatprep.subr.bf16.mxu0 0
        %899 = vmatpush1.bf16.msra.mxu0 0
        %900 = vmatprep.subr.bf16.mxu0 0
        %901 = vmatpush1.bf16.msra.mxu0 0
        %902 = vmatprep.subr.bf16.mxu0 0
        %903 = vmatpush1.bf16.msra.mxu0 0
        %904 = vmatprep.subr.bf16.mxu0 0
        %905 = vmatpush1.bf16.msra.mxu0 0
        %906 = vmatprep.subr.bf16.mxu0 0
        %907 = vmatpush1.bf16.msra.mxu0 0
        %908 = vmatprep.subr.bf16.mxu0 0
        %909 = vmatpush1.bf16.msra.mxu0 0
        %910 = vmatprep.subr.bf16.mxu0 0
        %911 = vmatpush1.bf16.msra.mxu0 0
        %912 = vmatprep.subr.bf16.mxu0 0
        %913 = vmatpush1.bf16.msra.mxu0 0
        %914 = vmatprep.subr.bf16.mxu0 0
        %915 = vmatpush1.bf16.msra.mxu0 0
        %916 = vmatprep.mubr.bf16.mxu0 0
        %917 = vmatmul.mubr.bf16.gmra.mrb[0].mxu0 %v482
        %v918 = vpop.f32.mrb[0].mxu0
        %v919 = vadd.f32 0.0, %v918
        %v920 = vpop.f32.mrb[0].mxu0
        %v921 = vpop.f32.mrb[0].mxu0
        %v922 = vpop.f32.mrb[0].mxu0
        %923 = vdwg.mxu0
        %v924 = vpack.c.bf16 %v805, %v805
        %v925 = vpack.c.bf16 %v862, %v862
        %v927 = vsel %vm638, %v924, 0
        %v930 = vsel %vm638, %v925, 0
        %932 = vmatprep.subr.bf16.mxu0 0
        %933 = vmatpush1.bf16.xpose.msra.mxu0 %v930
        %934 = vmatprep.subr.bf16.mxu0 0
        %935 = vmatpush1.bf16.xpose.msra.mxu0 0
        %936 = vmatprep.subr.bf16.mxu0 0
        %937 = vmatpush1.bf16.xpose.msra.mxu0 0
        %938 = vmatprep.subr.bf16.mxu0 0
        %939 = vmatpush1.bf16.xpose.msra.mxu0 0
        %940 = vmatprep.subr.bf16.mxu0 0
        %941 = vmatpush1.bf16.xpose.msra.mxu0 0
        %942 = vmatprep.subr.bf16.mxu0 0
        %943 = vmatpush1.bf16.xpose.msra.mxu0 0
        %944 = vmatprep.subr.bf16.mxu0 0
        %945 = vmatpush1.bf16.xpose.msra.mxu0 0
        %946 = vmatprep.subr.bf16.mxu0 0
        %947 = vmatpush1.bf16.xpose.msra.mxu0 0
        %948 = vmatprep.subr.bf16.mxu0 0
        %949 = vmatpush1.bf16.xpose.msra.mxu0 0
        %950 = vmatprep.subr.bf16.mxu0 0
        %951 = vmatpush1.bf16.xpose.msra.mxu0 0
        %952 = vmatprep.subr.bf16.mxu0 0
        %953 = vmatpush1.bf16.xpose.msra.mxu0 0
        %954 = vmatprep.subr.bf16.mxu0 0
        %955 = vmatpush1.bf16.xpose.msra.mxu0 0
        %956 = vmatprep.subr.bf16.mxu0 0
        %957 = vmatpush1.bf16.xpose.msra.mxu0 0
        %958 = vmatprep.subr.bf16.mxu0 0
        %959 = vmatpush1.bf16.xpose.msra.mxu0 0
        %960 = vmatprep.subr.bf16.mxu0 0
        %961 = vmatpush1.bf16.xpose.msra.mxu0 0
        %962 = vmatprep.subr.bf16.mxu0 0
        %963 = vmatpush1.bf16.xpose.msra.mxu0 0
        %964 = vmatprep.mubr.bf16.mxu0 0
        %965 = vmatmul.mubr.bf16.gmra.mrb[0].mxu0 %v927
        %v966 = vpop.f32.mrb[0].mxu0
        %v967 = vadd.f32 0.0, %v966
        %v968 = vpop.f32.mrb[0].mxu0
        %v969 = vpop.f32.mrb[0].mxu0
        %v970 = vpop.f32.mrb[0].mxu0
        %971 = vdwg.mxu0
        %v972 = vsel %vm638, %v967, -inf
        %973 = vmax.xlane.f32.xlu0 %v972
        %v974 = vpop.xlane.xlu0 %973
        %v975 = vsub.f32 %v967, %v974
        %v976 = vmul.f32 %v975, 1.442695
        %v977 = vpow.pop %v976
        %v978 = vsel %vm638, %v977, 0.0
        %979 = vadd.xlane.f32.xlu0 %v978
        %v980 = vpop.xlane.xlu0 %979
        %v981 = vrcp.pop %v980
        %v982 = vmul.f32 %v977, %v981
        %vm983 = vcmp.ne.f32.partialorder %v980, %v980
        %vm984 = vcmp.eq.f32.partialorder %v980, 0.0
        %vm985 = vmor %vm983, %vm984
        %v986 = vsel %vm985, 1, 0
        %vm987 = vcmp.eq.s32.totalorder %v986, 1
        %v988 = vsel %vm987, 0.0, %v982
        %v989 = vpack.c.bf16 %v988, %v988
        %v990 = vpack.c.bf16 %v919, %v919
        %v992 = vsel %vm638, %v989, 0
        %v995 = vsel %vm707, %v990, 0
        %997 = vmatprep.subr.bf16.mxu0 0
        %998 = vmatpush1.bf16.msra.mxu0 %v995
        %999 = vmatprep.subr.bf16.mxu0 0
        %1000 = vmatpush1.bf16.msra.mxu0 0
        %1001 = vmatprep.subr.bf16.mxu0 0
        %1002 = vmatpush1.bf16.msra.mxu0 0
        %1003 = vmatprep.subr.bf16.mxu0 0
        %1004 = vmatpush1.bf16.msra.mxu0 0
        %1005 = vmatprep.subr.bf16.mxu0 0
        %1006 = vmatpush1.bf16.msra.mxu0 0
        %1007 = vmatprep.subr.bf16.mxu0 0
        %1008 = vmatpush1.bf16.msra.mxu0 0
        %1009 = vmatprep.subr.bf16.mxu0 0
        %1010 = vmatpush1.bf16.msra.mxu0 0
        %1011 = vmatprep.subr.bf16.mxu0 0
        %1012 = vmatpush1.bf16.msra.mxu0 0
        %1013 = vmatprep.subr.bf16.mxu0 0
        %1014 = vmatpush1.bf16.msra.mxu0 0
        %1015 = vmatprep.subr.bf16.mxu0 0
        %1016 = vmatpush1.bf16.msra.mxu0 0
        %1017 = vmatprep.subr.bf16.mxu0 0
        %1018 = vmatpush1.bf16.msra.mxu0 0
        %1019 = vmatprep.subr.bf16.mxu0 0
        %1020 = vmatpush1.bf16.msra.mxu0 0
        %1021 = vmatprep.subr.bf16.mxu0 0
        %1022 = vmatpush1.bf16.msra.mxu0 0
        %1023 = vmatprep.subr.bf16.mxu0 0
        %1024 = vmatpush1.bf16.msra.mxu0 0
        %1025 = vmatprep.subr.bf16.mxu0 0
        %1026 = vmatpush1.bf16.msra.mxu0 0
        %1027 = vmatprep.subr.bf16.mxu0 0
        %1028 = vmatpush1.bf16.msra.mxu0 0
        %1029 = vmatprep.mubr.bf16.mxu0 0
        %1030 = vmatmul.mubr.bf16.gmra.mrb[0].mxu0 %v992
        %v1031 = vpop.f32.mrb[0].mxu0
        %v1032 = vadd.f32 0.0, %v1031
        %v1033 = vpop.f32.mrb[0].mxu0
        %v1034 = vpop.f32.mrb[0].mxu0
        %v1035 = vpop.f32.mrb[0].mxu0
        %1036 = vdwg.mxu0
        %v1037 = vpack.c.bf16 %v1032, %v1032
        %s1038 = scalar_lea.vmem %s4, 4
        %v1039 = vld [vmem:[%s1038] sm:$0xf]
        %v1041 = vsel %vm638, %v1037, 0
        %v1044 = vsel %vm707, %v1039, 0
        %1046 = vmatprep.subr.bf16.mxu0 0
        %1047 = vmatpush1.bf16.msra.mxu0 %v1044
        %1048 = vmatprep.subr.bf16.mxu0 0
        %1049 = vmatpush1.bf16.msra.mxu0 0
        %1050 = vmatprep.subr.bf16.mxu0 0
        %1051 = vmatpush1.bf16.msra.mxu0 0
        %1052 = vmatprep.subr.bf16.mxu0 0
        %1053 = vmatpush1.bf16.msra.mxu0 0
        %1054 = vmatprep.subr.bf16.mxu0 0
        %1055 = vmatpush1.bf16.msra.mxu0 0
        %1056 = vmatprep.subr.bf16.mxu0 0
        %1057 = vmatpush1.bf16.msra.mxu0 0
        %1058 = vmatprep.subr.bf16.mxu0 0
        %1059 = vmatpush1.bf16.msra.mxu0 0
        %1060 = vmatprep.subr.bf16.mxu0 0
        %1061 = vmatpush1.bf16.msra.mxu0 0
        %1062 = vmatprep.subr.bf16.mxu0 0
        %1063 = vmatpush1.bf16.msra.mxu0 0
        %1064 = vmatprep.subr.bf16.mxu0 0
        %1065 = vmatpush1.bf16.msra.mxu0 0
        %1066 = vmatprep.subr.bf16.mxu0 0
        %1067 = vmatpush1.bf16.msra.mxu0 0
        %1068 = vmatprep.subr.bf16.mxu0 0
        %1069 = vmatpush1.bf16.msra.mxu0 0
        %1070 = vmatprep.subr.bf16.mxu0 0
        %1071 = vmatpush1.bf16.msra.mxu0 0
        %1072 = vmatprep.subr.bf16.mxu0 0
        %1073 = vmatpush1.bf16.msra.mxu0 0
        %1074 = vmatprep.subr.bf16.mxu0 0
        %1075 = vmatpush1.bf16.msra.mxu0 0
        %1076 = vmatprep.subr.bf16.mxu0 0
        %1077 = vmatpush1.bf16.msra.mxu0 0
        %1078 = vmatprep.mubr.bf16.mxu0 0
        %1079 = vmatmul.mubr.bf16.gmra.mrb[0].mxu0 %v1041
        %v1080 = vpop.f32.mrb[0].mxu0
        %v1081 = vadd.f32 0.0, %v1080
        %v1082 = vpop.f32.mrb[0].mxu0
        %v1083 = vpop.f32.mrb[0].mxu0
        %v1084 = vpop.f32.mrb[0].mxu0
        %1085 = vdwg.mxu0
        %v1087 = vsel %vm638, %v751, 0
        %v1090 = vsel %vm707, %v752, 0
        %1092 = vmatprep.subr.bf16.mxu0 0
        %1093 = vmatpush1.bf16.msra.mxu0 %v1090
        %1094 = vmatprep.subr.bf16.mxu0 0
        %1095 = vmatpush1.bf16.msra.mxu0 0
        %1096 = vmatprep.subr.bf16.mxu0 0
        %1097 = vmatpush1.bf16.msra.mxu0 0
        %1098 = vmatprep.subr.bf16.mxu0 0
        %1099 = vmatpush1.bf16.msra.mxu0 0
        %1100 = vmatprep.subr.bf16.mxu0 0
        %1101 = vmatpush1.bf16.msra.mxu0 0
        %1102 = vmatprep.subr.bf16.mxu0 0
        %1103 = vmatpush1.bf16.msra.mxu0 0
        %1104 = vmatprep.subr.bf16.mxu0 0
        %1105 = vmatpush1.bf16.msra.mxu0 0
        %1106 = vmatprep.subr.bf16.mxu0 0
        %1107 = vmatpush1.bf16.msra.mxu0 0
        %1108 = vmatprep.subr.bf16.mxu0 0
        %1109 = vmatpush1.bf16.msra.mxu0 0
        %1110 = vmatprep.subr.bf16.mxu0 0
        %1111 = vmatpush1.bf16.msra.mxu0 0
        %1112 = vmatprep.subr.bf16.mxu0 0
        %1113 = vmatpush1.bf16.msra.mxu0 0
        %1114 = vmatprep.subr.bf16.mxu0 0
        %1115 = vmatpush1.bf16.msra.mxu0 0
        %1116 = vmatprep.subr.bf16.mxu0 0
        %1117 = vmatpush1.bf16.msra.mxu0 0
        %1118 = vmatprep.subr.bf16.mxu0 0
        %1119 = vmatpush1.bf16.msra.mxu0 0
        %1120 = vmatprep.subr.bf16.mxu0 0
        %1121 = vmatpush1.bf16.msra.mxu0 0
        %1122 = vmatprep.subr.bf16.mxu0 0
        %1123 = vmatpush1.bf16.msra.mxu0 0
        %1124 = vmatprep.mubr.bf16.mxu0 0
        %1125 = vmatmul.mubr.bf16.gmra.mrb[0].mxu0 %v1087
        %v1126 = vpop.f32.mrb[0].mxu0
        %v1127 = vadd.f32 %v1081, %v1126
        %v1128 = vpop.f32.mrb[0].mxu0
        %v1129 = vpop.f32.mrb[0].mxu0
        %v1130 = vpop.f32.mrb[0].mxu0
        %1131 = vdwg.mxu0
        %s1132 = scalar_lea.vmem %s1, 32
        %v1133 = vld [vmem:[%s1132] sm:$0xf]
        %v1134 = vld [vmem:[%s1132 + $0x4] sm:$0xf]
        %v1135 = vld [vmem:[%s1132 + $0x8] sm:$0xf]
        %v1136 = vld [vmem:[%s1132 + $0xc] sm:$0xf]
        %v1141 = vunpack.c.l.b16 %v1133
        %v1142 = vunpack.c.l.b16 %v1134
        %v1143 = vunpack.c.l.b16 %v1135
        %v1144 = vunpack.c.l.b16 %v1136
        %v1145 = vpack.c.b16 %v1142, %v1141
        %v1146 = vpack.c.b16 %v1144, %v1143
        %1149 = vmatprep.subr.bf16.mxu0 0
        %1150 = vmatpush1.bf16.msra.mxu0 %v1145
        %1151 = vmatprep.subr.bf16.mxu0 0
        %1152 = vmatpush1.bf16.msra.mxu0 %v1146
        %1153 = vmatprep.subr.bf16.mxu0 0
        %1154 = vmatpush1.bf16.msra.mxu0 0
        %1155 = vmatprep.subr.bf16.mxu0 0
        %1156 = vmatpush1.bf16.msra.mxu0 0
        %1157 = vmatprep.subr.bf16.mxu0 0
        %1158 = vmatpush1.bf16.msra.mxu0 0
        %1159 = vmatprep.subr.bf16.mxu0 0
        %1160 = vmatpush1.bf16.msra.mxu0 0
        %1161 = vmatprep.subr.bf16.mxu0 0
        %1162 = vmatpush1.bf16.msra.mxu0 0
        %1163 = vmatprep.subr.bf16.mxu0 0
        %1164 = vmatpush1.bf16.msra.mxu0 0
        %1165 = vmatprep.subr.bf16.mxu0 0
        %1166 = vmatpush1.bf16.msra.mxu0 0
        %1167 = vmatprep.subr.bf16.mxu0 0
        %1168 = vmatpush1.bf16.msra.mxu0 0
        %1169 = vmatprep.subr.bf16.mxu0 0
        %1170 = vmatpush1.bf16.msra.mxu0 0
        %1171 = vmatprep.subr.bf16.mxu0 0
        %1172 = vmatpush1.bf16.msra.mxu0 0
        %1173 = vmatprep.subr.bf16.mxu0 0
        %1174 = vmatpush1.bf16.msra.mxu0 0
        %1175 = vmatprep.subr.bf16.mxu0 0
        %1176 = vmatpush1.bf16.msra.mxu0 0
        %1177 = vmatprep.subr.bf16.mxu0 0
        %1178 = vmatpush1.bf16.msra.mxu0 0
        %1179 = vmatprep.subr.bf16.mxu0 0
        %1180 = vmatpush1.bf16.msra.mxu0 0
        %1181 = vmatprep.mubr.bf16.mxu0 0
        %1182 = vmatmul.mubr.bf16.gmra.mrb[0].mxu0 %v482
        %v1183 = vpop.f32.mrb[0].mxu0
        %v1184 = vadd.f32 0.0, %v1183
        %v1185 = vpop.f32.mrb[0].mxu0
        %v1186 = vpop.f32.mrb[0].mxu0
        %v1187 = vpop.f32.mrb[0].mxu0
        %1188 = vdwg.mxu0
        %s1189 = scalar_lea.vmem %s2, 32
        %v1190 = vld [vmem:[%s1189] sm:$0xf]
        %v1191 = vld [vmem:[%s1189 + $0x4] sm:$0xf]
        %v1192 = vld [vmem:[%s1189 + $0x8] sm:$0xf]
        %v1193 = vld [vmem:[%s1189 + $0xc] sm:$0xf]
        %v1198 = vunpack.c.l.b16 %v1190
        %v1199 = vunpack.c.l.b16 %v1191
        %v1200 = vunpack.c.l.b16 %v1192
        %v1201 = vunpack.c.l.b16 %v1193
        %v1202 = vpack.c.b16 %v1199, %v1198
        %v1203 = vpack.c.b16 %v1201, %v1200
        %1206 = vmatprep.subr.bf16.mxu0 0
        %1207 = vmatpush1.bf16.msra.mxu0 %v1202
        %1208 = vmatprep.subr.bf16.mxu0 0
        %1209 = vmatpush1.bf16.msra.mxu0 %v1203
        %1210 = vmatprep.subr.bf16.mxu0 0
        %1211 = vmatpush1.bf16.msra.mxu0 0
        %1212 = vmatprep.subr.bf16.mxu0 0
        %1213 = vmatpush1.bf16.msra.mxu0 0
        %1214 = vmatprep.subr.bf16.mxu0 0
        %1215 = vmatpush1.bf16.msra.mxu0 0
        %1216 = vmatprep.subr.bf16.mxu0 0
        %1217 = vmatpush1.bf16.msra.mxu0 0
        %1218 = vmatprep.subr.bf16.mxu0 0
        %1219 = vmatpush1.bf16.msra.mxu0 0
        %1220 = vmatprep.subr.bf16.mxu0 0
        %1221 = vmatpush1.bf16.msra.mxu0 0
        %1222 = vmatprep.subr.bf16.mxu0 0
        %1223 = vmatpush1.bf16.msra.mxu0 0
        %1224 = vmatprep.subr.bf16.mxu0 0
        %1225 = vmatpush1.bf16.msra.mxu0 0
        %1226 = vmatprep.subr.bf16.mxu0 0
        %1227 = vmatpush1.bf16.msra.mxu0 0
        %1228 = vmatprep.subr.bf16.mxu0 0
        %1229 = vmatpush1.bf16.msra.mxu0 0
        %1230 = vmatprep.subr.bf16.mxu0 0
        %1231 = vmatpush1.bf16.msra.mxu0 0
        %1232 = vmatprep.subr.bf16.mxu0 0
        %1233 = vmatpush1.bf16.msra.mxu0 0
        %1234 = vmatprep.subr.bf16.mxu0 0
        %1235 = vmatpush1.bf16.msra.mxu0 0
        %1236 = vmatprep.subr.bf16.mxu0 0
        %1237 = vmatpush1.bf16.msra.mxu0 0
        %1238 = vmatprep.mubr.bf16.mxu0 0
        %1239 = vmatmul.mubr.bf16.gmra.mrb[0].mxu0 %v482
        %v1240 = vpop.f32.mrb[0].mxu0
        %v1241 = vadd.f32 0.0, %v1240
        %v1242 = vpop.f32.mrb[0].mxu0
        %v1243 = vpop.f32.mrb[0].mxu0
        %v1244 = vpop.f32.mrb[0].mxu0
        %1245 = vdwg.mxu0
        %s1246 = scalar_lea.vmem %s3, 32
        %v1247 = vld [vmem:[%s1246] sm:$0xf]
        %v1248 = vld [vmem:[%s1246 + $0x4] sm:$0xf]
        %v1249 = vld [vmem:[%s1246 + $0x8] sm:$0xf]
        %v1250 = vld [vmem:[%s1246 + $0xc] sm:$0xf]
        %v1255 = vunpack.c.l.b16 %v1247
        %v1256 = vunpack.c.l.b16 %v1248
        %v1257 = vunpack.c.l.b16 %v1249
        %v1258 = vunpack.c.l.b16 %v1250
        %v1259 = vpack.c.b16 %v1256, %v1255
        %v1260 = vpack.c.b16 %v1258, %v1257
        %1263 = vmatprep.subr.bf16.mxu0 0
        %1264 = vmatpush1.bf16.msra.mxu0 %v1259
        %1265 = vmatprep.subr.bf16.mxu0 0
        %1266 = vmatpush1.bf16.msra.mxu0 %v1260
        %1267 = vmatprep.subr.bf16.mxu0 0
        %1268 = vmatpush1.bf16.msra.mxu0 0
        %1269 = vmatprep.subr.bf16.mxu0 0
        %1270 = vmatpush1.bf16.msra.mxu0 0
        %1271 = vmatprep.subr.bf16.mxu0 0
        %1272 = vmatpush1.bf16.msra.mxu0 0
        %1273 = vmatprep.subr.bf16.mxu0 0
        %1274 = vmatpush1.bf16.msra.mxu0 0
        %1275 = vmatprep.subr.bf16.mxu0 0
        %1276 = vmatpush1.bf16.msra.mxu0 0
        %1277 = vmatprep.subr.bf16.mxu0 0
        %1278 = vmatpush1.bf16.msra.mxu0 0
        %1279 = vmatprep.subr.bf16.mxu0 0
        %1280 = vmatpush1.bf16.msra.mxu0 0
        %1281 = vmatprep.subr.bf16.mxu0 0
        %1282 = vmatpush1.bf16.msra.mxu0 0
        %1283 = vmatprep.subr.bf16.mxu0 0
        %1284 = vmatpush1.bf16.msra.mxu0 0
        %1285 = vmatprep.subr.bf16.mxu0 0
        %1286 = vmatpush1.bf16.msra.mxu0 0
        %1287 = vmatprep.subr.bf16.mxu0 0
        %1288 = vmatpush1.bf16.msra.mxu0 0
        %1289 = vmatprep.subr.bf16.mxu0 0
        %1290 = vmatpush1.bf16.msra.mxu0 0
        %1291 = vmatprep.subr.bf16.mxu0 0
        %1292 = vmatpush1.bf16.msra.mxu0 0
        %1293 = vmatprep.subr.bf16.mxu0 0
        %1294 = vmatpush1.bf16.msra.mxu0 0
        %1295 = vmatprep.mubr.bf16.mxu0 0
        %1296 = vmatmul.mubr.bf16.gmra.mrb[0].mxu0 %v482
        %v1297 = vpop.f32.mrb[0].mxu0
        %v1298 = vadd.f32 0.0, %v1297
        %v1299 = vpop.f32.mrb[0].mxu0
        %v1300 = vpop.f32.mrb[0].mxu0
        %v1301 = vpop.f32.mrb[0].mxu0
        %1302 = vdwg.mxu0
        %v1303 = vpack.c.bf16 %v1184, %v1184
        %v1304 = vpack.c.bf16 %v1241, %v1241
        %v1306 = vsel %vm638, %v1303, 0
        %v1309 = vsel %vm638, %v1304, 0
        %1311 = vmatprep.subr.bf16.mxu0 0
        %1312 = vmatpush1.bf16.xpose.msra.mxu0 %v1309
        %1313 = vmatprep.subr.bf16.mxu0 0
        %1314 = vmatpush1.bf16.xpose.msra.mxu0 0
        %1315 = vmatprep.subr.bf16.mxu0 0
        %1316 = vmatpush1.bf16.xpose.msra.mxu0 0
        %1317 = vmatprep.subr.bf16.mxu0 0
        %1318 = vmatpush1.bf16.xpose.msra.mxu0 0
        %1319 = vmatprep.subr.bf16.mxu0 0
        %1320 = vmatpush1.bf16.xpose.msra.mxu0 0
        %1321 = vmatprep.subr.bf16.mxu0 0
        %1322 = vmatpush1.bf16.xpose.msra.mxu0 0
        %1323 = vmatprep.subr.bf16.mxu0 0
        %1324 = vmatpush1.bf16.xpose.msra.mxu0 0
        %1325 = vmatprep.subr.bf16.mxu0 0
        %1326 = vmatpush1.bf16.xpose.msra.mxu0 0
        %1327 = vmatprep.subr.bf16.mxu0 0
        %1328 = vmatpush1.bf16.xpose.msra.mxu0 0
        %1329 = vmatprep.subr.bf16.mxu0 0
        %1330 = vmatpush1.bf16.xpose.msra.mxu0 0
        %1331 = vmatprep.subr.bf16.mxu0 0
        %1332 = vmatpush1.bf16.xpose.msra.mxu0 0
        %1333 = vmatprep.subr.bf16.mxu0 0
        %1334 = vmatpush1.bf16.xpose.msra.mxu0 0
        %1335 = vmatprep.subr.bf16.mxu0 0
        %1336 = vmatpush1.bf16.xpose.msra.mxu0 0
        %1337 = vmatprep.subr.bf16.mxu0 0
        %1338 = vmatpush1.bf16.xpose.msra.mxu0 0
        %1339 = vmatprep.subr.bf16.mxu0 0
        %1340 = vmatpush1.bf16.xpose.msra.mxu0 0
        %1341 = vmatprep.subr.bf16.mxu0 0
        %1342 = vmatpush1.bf16.xpose.msra.mxu0 0
        %1343 = vmatprep.mubr.bf16.mxu0 0
        %1344 = vmatmul.mubr.bf16.gmra.mrb[0].mxu0 %v1306
        %v1345 = vpop.f32.mrb[0].mxu0
        %v1346 = vadd.f32 0.0, %v1345
        %v1347 = vpop.f32.mrb[0].mxu0
        %v1348 = vpop.f32.mrb[0].mxu0
        %v1349 = vpop.f32.mrb[0].mxu0
        %1350 = vdwg.mxu0
        %v1351 = vsel %vm638, %v1346, -inf
        %1352 = vmax.xlane.f32.xlu0 %v1351
        %v1353 = vpop.xlane.xlu0 %1352
        %v1354 = vsub.f32 %v1346, %v1353
        %v1355 = vmul.f32 %v1354, 1.442695
        %v1356 = vpow.pop %v1355
        %v1357 = vsel %vm638, %v1356, 0.0
        %1358 = vadd.xlane.f32.xlu0 %v1357
        %v1359 = vpop.xlane.xlu0 %1358
        %v1360 = vrcp.pop %v1359
        %v1361 = vmul.f32 %v1356, %v1360
        %vm1362 = vcmp.ne.f32.partialorder %v1359, %v1359
        %vm1363 = vcmp.eq.f32.partialorder %v1359, 0.0
        %vm1364 = vmor %vm1362, %vm1363
        %v1365 = vsel %vm1364, 1, 0
        %vm1366 = vcmp.eq.s32.totalorder %v1365, 1
        %v1367 = vsel %vm1366, 0.0, %v1361
        %v1368 = vpack.c.bf16 %v1367, %v1367
        %v1369 = vpack.c.bf16 %v1298, %v1298
        %v1371 = vsel %vm638, %v1368, 0
        %v1374 = vsel %vm707, %v1369, 0
        %1376 = vmatprep.subr.bf16.mxu0 0
        %1377 = vmatpush1.bf16.msra.mxu0 %v1374
        %1378 = vmatprep.subr.bf16.mxu0 0
        %1379 = vmatpush1.bf16.msra.mxu0 0
        %1380 = vmatprep.subr.bf16.mxu0 0
        %1381 = vmatpush1.bf16.msra.mxu0 0
        %1382 = vmatprep.subr.bf16.mxu0 0
        %1383 = vmatpush1.bf16.msra.mxu0 0
        %1384 = vmatprep.subr.bf16.mxu0 0
        %1385 = vmatpush1.bf16.msra.mxu0 0
        %1386 = vmatprep.subr.bf16.mxu0 0
        %1387 = vmatpush1.bf16.msra.mxu0 0
        %1388 = vmatprep.subr.bf16.mxu0 0
        %1389 = vmatpush1.bf16.msra.mxu0 0
        %1390 = vmatprep.subr.bf16.mxu0 0
        %1391 = vmatpush1.bf16.msra.mxu0 0
        %1392 = vmatprep.subr.bf16.mxu0 0
        %1393 = vmatpush1.bf16.msra.mxu0 0
        %1394 = vmatprep.subr.bf16.mxu0 0
        %1395 = vmatpush1.bf16.msra.mxu0 0
        %1396 = vmatprep.subr.bf16.mxu0 0
        %1397 = vmatpush1.bf16.msra.mxu0 0
        %1398 = vmatprep.subr.bf16.mxu0 0
        %1399 = vmatpush1.bf16.msra.mxu0 0
        %1400 = vmatprep.subr.bf16.mxu0 0
        %1401 = vmatpush1.bf16.msra.mxu0 0
        %1402 = vmatprep.subr.bf16.mxu0 0
        %1403 = vmatpush1.bf16.msra.mxu0 0
        %1404 = vmatprep.subr.bf16.mxu0 0
        %1405 = vmatpush1.bf16.msra.mxu0 0
        %1406 = vmatprep.subr.bf16.mxu0 0
        %1407 = vmatpush1.bf16.msra.mxu0 0
        %1408 = vmatprep.mubr.bf16.mxu0 0
        %1409 = vmatmul.mubr.bf16.gmra.mrb[0].mxu0 %v1371
        %v1410 = vpop.f32.mrb[0].mxu0
        %v1411 = vadd.f32 0.0, %v1410
        %v1412 = vpop.f32.mrb[0].mxu0
        %v1413 = vpop.f32.mrb[0].mxu0
        %v1414 = vpop.f32.mrb[0].mxu0
        %1415 = vdwg.mxu0
        %v1416 = vpack.c.bf16 %v1411, %v1411
        %s1417 = scalar_lea.vmem %s4, 8
        %v1418 = vld [vmem:[%s1417] sm:$0xf]
        %v1420 = vsel %vm638, %v1416, 0
        %v1423 = vsel %vm707, %v1418, 0
        %1425 = vmatprep.subr.bf16.mxu0 0
        %1426 = vmatpush1.bf16.msra.mxu0 %v1423
        %1427 = vmatprep.subr.bf16.mxu0 0
        %1428 = vmatpush1.bf16.msra.mxu0 0
        %1429 = vmatprep.subr.bf16.mxu0 0
        %1430 = vmatpush1.bf16.msra.mxu0 0
        %1431 = vmatprep.subr.bf16.mxu0 0
        %1432 = vmatpush1.bf16.msra.mxu0 0
        %1433 = vmatprep.subr.bf16.mxu0 0
        %1434 = vmatpush1.bf16.msra.mxu0 0
        %1435 = vmatprep.subr.bf16.mxu0 0
        %1436 = vmatpush1.bf16.msra.mxu0 0
        %1437 = vmatprep.subr.bf16.mxu0 0
        %1438 = vmatpush1.bf16.msra.mxu0 0
        %1439 = vmatprep.subr.bf16.mxu0 0
        %1440 = vmatpush1.bf16.msra.mxu0 0
        %1441 = vmatprep.subr.bf16.mxu0 0
        %1442 = vmatpush1.bf16.msra.mxu0 0
        %1443 = vmatprep.subr.bf16.mxu0 0
        %1444 = vmatpush1.bf16.msra.mxu0 0
        %1445 = vmatprep.subr.bf16.mxu0 0
        %1446 = vmatpush1.bf16.msra.mxu0 0
        %1447 = vmatprep.subr.bf16.mxu0 0
        %1448 = vmatpush1.bf16.msra.mxu0 0
        %1449 = vmatprep.subr.bf16.mxu0 0
        %1450 = vmatpush1.bf16.msra.mxu0 0
        %1451 = vmatprep.subr.bf16.mxu0 0
        %1452 = vmatpush1.bf16.msra.mxu0 0
        %1453 = vmatprep.subr.bf16.mxu0 0
        %1454 = vmatpush1.bf16.msra.mxu0 0
        %1455 = vmatprep.subr.bf16.mxu0 0
        %1456 = vmatpush1.bf16.msra.mxu0 0
        %1457 = vmatprep.mubr.bf16.mxu0 0
        %1458 = vmatmul.mubr.bf16.gmra.mrb[0].mxu0 %v1420
        %v1459 = vpop.f32.mrb[0].mxu0
        %v1460 = vadd.f32 0.0, %v1459
        %v1461 = vpop.f32.mrb[0].mxu0
        %v1462 = vpop.f32.mrb[0].mxu0
        %v1463 = vpop.f32.mrb[0].mxu0
        %1464 = vdwg.mxu0
        %v1465 = vadd.f32 %v1127, %v1460
        %s1466 = scalar_lea.vmem %s1, 48
        %v1467 = vld [vmem:[%s1466] sm:$0xf]
        %v1468 = vld [vmem:[%s1466 + $0x4] sm:$0xf]
        %v1469 = vld [vmem:[%s1466 + $0x8] sm:$0xf]
        %v1470 = vld [vmem:[%s1466 + $0xc] sm:$0xf]
        %v1475 = vunpack.c.l.b16 %v1467
        %v1476 = vunpack.c.l.b16 %v1468
        %v1477 = vunpack.c.l.b16 %v1469
        %v1478 = vunpack.c.l.b16 %v1470
        %v1479 = vpack.c.b16 %v1476, %v1475
        %v1480 = vpack.c.b16 %v1478, %v1477
        %1483 = vmatprep.subr.bf16.mxu0 0
        %1484 = vmatpush1.bf16.msra.mxu0 %v1479
        %1485 = vmatprep.subr.bf16.mxu0 0
        %1486 = vmatpush1.bf16.msra.mxu0 %v1480
        %1487 = vmatprep.subr.bf16.mxu0 0
        %1488 = vmatpush1.bf16.msra.mxu0 0
        %1489 = vmatprep.subr.bf16.mxu0 0
        %1490 = vmatpush1.bf16.msra.mxu0 0
        %1491 = vmatprep.subr.bf16.mxu0 0
        %1492 = vmatpush1.bf16.msra.mxu0 0
        %1493 = vmatprep.subr.bf16.mxu0 0
        %1494 = vmatpush1.bf16.msra.mxu0 0
        %1495 = vmatprep.subr.bf16.mxu0 0
        %1496 = vmatpush1.bf16.msra.mxu0 0
        %1497 = vmatprep.subr.bf16.mxu0 0
        %1498 = vmatpush1.bf16.msra.mxu0 0
        %1499 = vmatprep.subr.bf16.mxu0 0
        %1500 = vmatpush1.bf16.msra.mxu0 0
        %1501 = vmatprep.subr.bf16.mxu0 0
        %1502 = vmatpush1.bf16.msra.mxu0 0
        %1503 = vmatprep.subr.bf16.mxu0 0
        %1504 = vmatpush1.bf16.msra.mxu0 0
        %1505 = vmatprep.subr.bf16.mxu0 0
        %1506 = vmatpush1.bf16.msra.mxu0 0
        %1507 = vmatprep.subr.bf16.mxu0 0
        %1508 = vmatpush1.bf16.msra.mxu0 0
        %1509 = vmatprep.subr.bf16.mxu0 0
        %1510 = vmatpush1.bf16.msra.mxu0 0
        %1511 = vmatprep.subr.bf16.mxu0 0
        %1512 = vmatpush1.bf16.msra.mxu0 0
        %1513 = vmatprep.subr.bf16.mxu0 0
        %1514 = vmatpush1.bf16.msra.mxu0 0
        %1515 = vmatprep.mubr.bf16.mxu0 0
        %1516 = vmatmul.mubr.bf16.gmra.mrb[0].mxu0 %v482
        %v1517 = vpop.f32.mrb[0].mxu0
        %v1518 = vadd.f32 0.0, %v1517
        %v1519 = vpop.f32.mrb[0].mxu0
        %v1520 = vpop.f32.mrb[0].mxu0
        %v1521 = vpop.f32.mrb[0].mxu0
        %1522 = vdwg.mxu0
        %s1523 = scalar_lea.vmem %s2, 48
        %v1524 = vld [vmem:[%s1523] sm:$0xf]
        %v1525 = vld [vmem:[%s1523 + $0x4] sm:$0xf]
        %v1526 = vld [vmem:[%s1523 + $0x8] sm:$0xf]
        %v1527 = vld [vmem:[%s1523 + $0xc] sm:$0xf]
        %v1532 = vunpack.c.l.b16 %v1524
        %v1533 = vunpack.c.l.b16 %v1525
        %v1534 = vunpack.c.l.b16 %v1526
        %v1535 = vunpack.c.l.b16 %v1527
        %v1536 = vpack.c.b16 %v1533, %v1532
        %v1537 = vpack.c.b16 %v1535, %v1534
        %1540 = vmatprep.subr.bf16.mxu0 0
        %1541 = vmatpush1.bf16.msra.mxu0 %v1536
        %1542 = vmatprep.subr.bf16.mxu0 0
        %1543 = vmatpush1.bf16.msra.mxu0 %v1537
        %1544 = vmatprep.subr.bf16.mxu0 0
        %1545 = vmatpush1.bf16.msra.mxu0 0
        %1546 = vmatprep.subr.bf16.mxu0 0
        %1547 = vmatpush1.bf16.msra.mxu0 0
        %1548 = vmatprep.subr.bf16.mxu0 0
        %1549 = vmatpush1.bf16.msra.mxu0 0
        %1550 = vmatprep.subr.bf16.mxu0 0
        %1551 = vmatpush1.bf16.msra.mxu0 0
        %1552 = vmatprep.subr.bf16.mxu0 0
        %1553 = vmatpush1.bf16.msra.mxu0 0
        %1554 = vmatprep.subr.bf16.mxu0 0
        %1555 = vmatpush1.bf16.msra.mxu0 0
        %1556 = vmatprep.subr.bf16.mxu0 0
        %1557 = vmatpush1.bf16.msra.mxu0 0
        %1558 = vmatprep.subr.bf16.mxu0 0
        %1559 = vmatpush1.bf16.msra.mxu0 0
        %1560 = vmatprep.subr.bf16.mxu0 0
        %1561 = vmatpush1.bf16.msra.mxu0 0
        %1562 = vmatprep.subr.bf16.mxu0 0
        %1563 = vmatpush1.bf16.msra.mxu0 0
        %1564 = vmatprep.subr.bf16.mxu0 0
        %1565 = vmatpush1.bf16.msra.mxu0 0
        %1566 = vmatprep.subr.bf16.mxu0 0
        %1567 = vmatpush1.bf16.msra.mxu0 0
        %1568 = vmatprep.subr.bf16.mxu0 0
        %1569 = vmatpush1.bf16.msra.mxu0 0
        %1570 = vmatprep.subr.bf16.mxu0 0
        %1571 = vmatpush1.bf16.msra.mxu0 0
        %1572 = vmatprep.mubr.bf16.mxu0 0
        %1573 = vmatmul.mubr.bf16.gmra.mrb[0].mxu0 %v482
        %v1574 = vpop.f32.mrb[0].mxu0
        %v1575 = vadd.f32 0.0, %v1574
        %v1576 = vpop.f32.mrb[0].mxu0
        %v1577 = vpop.f32.mrb[0].mxu0
        %v1578 = vpop.f32.mrb[0].mxu0
        %1579 = vdwg.mxu0
        %s1580 = scalar_lea.vmem %s3, 48
        %v1581 = vld [vmem:[%s1580] sm:$0xf]
        %v1582 = vld [vmem:[%s1580 + $0x4] sm:$0xf]
        %v1583 = vld [vmem:[%s1580 + $0x8] sm:$0xf]
        %v1584 = vld [vmem:[%s1580 + $0xc] sm:$0xf]
        %v1589 = vunpack.c.l.b16 %v1581
        %v1590 = vunpack.c.l.b16 %v1582
        %v1591 = vunpack.c.l.b16 %v1583
        %v1592 = vunpack.c.l.b16 %v1584
        %v1593 = vpack.c.b16 %v1590, %v1589
        %v1594 = vpack.c.b16 %v1592, %v1591
        %1597 = vmatprep.subr.bf16.mxu0 0
        %1598 = vmatpush1.bf16.msra.mxu0 %v1593
        %1599 = vmatprep.subr.bf16.mxu0 0
        %1600 = vmatpush1.bf16.msra.mxu0 %v1594
        %1601 = vmatprep.subr.bf16.mxu0 0
        %1602 = vmatpush1.bf16.msra.mxu0 0
        %1603 = vmatprep.subr.bf16.mxu0 0
        %1604 = vmatpush1.bf16.msra.mxu0 0
        %1605 = vmatprep.subr.bf16.mxu0 0
        %1606 = vmatpush1.bf16.msra.mxu0 0
        %1607 = vmatprep.subr.bf16.mxu0 0
        %1608 = vmatpush1.bf16.msra.mxu0 0
        %1609 = vmatprep.subr.bf16.mxu0 0
        %1610 = vmatpush1.bf16.msra.mxu0 0
        %1611 = vmatprep.subr.bf16.mxu0 0
        %1612 = vmatpush1.bf16.msra.mxu0 0
        %1613 = vmatprep.subr.bf16.mxu0 0
        %1614 = vmatpush1.bf16.msra.mxu0 0
        %1615 = vmatprep.subr.bf16.mxu0 0
        %1616 = vmatpush1.bf16.msra.mxu0 0
        %1617 = vmatprep.subr.bf16.mxu0 0
        %1618 = vmatpush1.bf16.msra.mxu0 0
        %1619 = vmatprep.subr.bf16.mxu0 0
        %1620 = vmatpush1.bf16.msra.mxu0 0
        %1621 = vmatprep.subr.bf16.mxu0 0
        %1622 = vmatpush1.bf16.msra.mxu0 0
        %1623 = vmatprep.subr.bf16.mxu0 0
        %1624 = vmatpush1.bf16.msra.mxu0 0
        %1625 = vmatprep.subr.bf16.mxu0 0
        %1626 = vmatpush1.bf16.msra.mxu0 0
        %1627 = vmatprep.subr.bf16.mxu0 0
        %1628 = vmatpush1.bf16.msra.mxu0 0
        %1629 = vmatprep.mubr.bf16.mxu0 0
        %1630 = vmatmul.mubr.bf16.gmra.mrb[0].mxu0 %v482
        %v1631 = vpop.f32.mrb[0].mxu0
        %v1632 = vadd.f32 0.0, %v1631
        %v1633 = vpop.f32.mrb[0].mxu0
        %v1634 = vpop.f32.mrb[0].mxu0
        %v1635 = vpop.f32.mrb[0].mxu0
        %1636 = vdwg.mxu0
        %v1637 = vpack.c.bf16 %v1518, %v1518
        %v1638 = vpack.c.bf16 %v1575, %v1575
        %v1640 = vsel %vm638, %v1637, 0
        %v1643 = vsel %vm638, %v1638, 0
        %1645 = vmatprep.subr.bf16.mxu0 0
        %1646 = vmatpush1.bf16.xpose.msra.mxu0 %v1643
        %1647 = vmatprep.subr.bf16.mxu0 0
        %1648 = vmatpush1.bf16.xpose.msra.mxu0 0
        %1649 = vmatprep.subr.bf16.mxu0 0
        %1650 = vmatpush1.bf16.xpose.msra.mxu0 0
        %1651 = vmatprep.subr.bf16.mxu0 0
        %1652 = vmatpush1.bf16.xpose.msra.mxu0 0
        %1653 = vmatprep.subr.bf16.mxu0 0
        %1654 = vmatpush1.bf16.xpose.msra.mxu0 0
        %1655 = vmatprep.subr.bf16.mxu0 0
        %1656 = vmatpush1.bf16.xpose.msra.mxu0 0
        %1657 = vmatprep.subr.bf16.mxu0 0
        %1658 = vmatpush1.bf16.xpose.msra.mxu0 0
        %1659 = vmatprep.subr.bf16.mxu0 0
        %1660 = vmatpush1.bf16.xpose.msra.mxu0 0
        %1661 = vmatprep.subr.bf16.mxu0 0
        %1662 = vmatpush1.bf16.xpose.msra.mxu0 0
        %1663 = vmatprep.subr.bf16.mxu0 0
        %1664 = vmatpush1.bf16.xpose.msra.mxu0 0
        %1665 = vmatprep.subr.bf16.mxu0 0
        %1666 = vmatpush1.bf16.xpose.msra.mxu0 0
        %1667 = vmatprep.subr.bf16.mxu0 0
        %1668 = vmatpush1.bf16.xpose.msra.mxu0 0
        %1669 = vmatprep.subr.bf16.mxu0 0
        %1670 = vmatpush1.bf16.xpose.msra.mxu0 0
        %1671 = vmatprep.subr.bf16.mxu0 0
        %1672 = vmatpush1.bf16.xpose.msra.mxu0 0
        %1673 = vmatprep.subr.bf16.mxu0 0
        %1674 = vmatpush1.bf16.xpose.msra.mxu0 0
        %1675 = vmatprep.subr.bf16.mxu0 0
        %1676 = vmatpush1.bf16.xpose.msra.mxu0 0
        %1677 = vmatprep.mubr.bf16.mxu0 0
        %1678 = vmatmul.mubr.bf16.gmra.mrb[0].mxu0 %v1640
        %v1679 = vpop.f32.mrb[0].mxu0
        %v1680 = vadd.f32 0.0, %v1679
        %v1681 = vpop.f32.mrb[0].mxu0
        %v1682 = vpop.f32.mrb[0].mxu0
        %v1683 = vpop.f32.mrb[0].mxu0
        %1684 = vdwg.mxu0
        %v1685 = vsel %vm638, %v1680, -inf
        %1686 = vmax.xlane.f32.xlu0 %v1685
        %v1687 = vpop.xlane.xlu0 %1686
        %v1688 = vsub.f32 %v1680, %v1687
        %v1689 = vmul.f32 %v1688, 1.442695
        %v1690 = vpow.pop %v1689
        %v1691 = vsel %vm638, %v1690, 0.0
        %1692 = vadd.xlane.f32.xlu0 %v1691
        %v1693 = vpop.xlane.xlu0 %1692
        %v1694 = vrcp.pop %v1693
        %v1695 = vmul.f32 %v1690, %v1694
        %vm1696 = vcmp.ne.f32.partialorder %v1693, %v1693
        %vm1697 = vcmp.eq.f32.partialorder %v1693, 0.0
        %vm1698 = vmor %vm1696, %vm1697
        %v1699 = vsel %vm1698, 1, 0
        %vm1700 = vcmp.eq.s32.totalorder %v1699, 1
        %v1701 = vsel %vm1700, 0.0, %v1695
        %v1702 = vpack.c.bf16 %v1701, %v1701
        %v1703 = vpack.c.bf16 %v1632, %v1632
        %v1705 = vsel %vm638, %v1702, 0
        %v1708 = vsel %vm707, %v1703, 0
        %1710 = vmatprep.subr.bf16.mxu0 0
        %1711 = vmatpush1.bf16.msra.mxu0 %v1708
        %1712 = vmatprep.subr.bf16.mxu0 0
        %1713 = vmatpush1.bf16.msra.mxu0 0
        %1714 = vmatprep.subr.bf16.mxu0 0
        %1715 = vmatpush1.bf16.msra.mxu0 0
        %1716 = vmatprep.subr.bf16.mxu0 0
        %1717 = vmatpush1.bf16.msra.mxu0 0
        %1718 = vmatprep.subr.bf16.mxu0 0
        %1719 = vmatpush1.bf16.msra.mxu0 0
        %1720 = vmatprep.subr.bf16.mxu0 0
        %1721 = vmatpush1.bf16.msra.mxu0 0
        %1722 = vmatprep.subr.bf16.mxu0 0
        %1723 = vmatpush1.bf16.msra.mxu0 0
        %1724 = vmatprep.subr.bf16.mxu0 0
        %1725 = vmatpush1.bf16.msra.mxu0 0
        %1726 = vmatprep.subr.bf16.mxu0 0
        %1727 = vmatpush1.bf16.msra.mxu0 0
        %1728 = vmatprep.subr.bf16.mxu0 0
        %1729 = vmatpush1.bf16.msra.mxu0 0
        %1730 = vmatprep.subr.bf16.mxu0 0
        %1731 = vmatpush1.bf16.msra.mxu0 0
        %1732 = vmatprep.subr.bf16.mxu0 0
        %1733 = vmatpush1.bf16.msra.mxu0 0
        %1734 = vmatprep.subr.bf16.mxu0 0
        %1735 = vmatpush1.bf16.msra.mxu0 0
        %1736 = vmatprep.subr.bf16.mxu0 0
        %1737 = vmatpush1.bf16.msra.mxu0 0
        %1738 = vmatprep.subr.bf16.mxu0 0
        %1739 = vmatpush1.bf16.msra.mxu0 0
        %1740 = vmatprep.subr.bf16.mxu0 0
        %1741 = vmatpush1.bf16.msra.mxu0 0
        %1742 = vmatprep.mubr.bf16.mxu0 0
        %1743 = vmatmul.mubr.bf16.gmra.mrb[0].mxu0 %v1705
        %v1744 = vpop.f32.mrb[0].mxu0
        %v1745 = vadd.f32 0.0, %v1744
        %v1746 = vpop.f32.mrb[0].mxu0
        %v1747 = vpop.f32.mrb[0].mxu0
        %v1748 = vpop.f32.mrb[0].mxu0
        %1749 = vdwg.mxu0
        %v1750 = vpack.c.bf16 %v1745, %v1745
        %s1751 = scalar_lea.vmem %s4, 12
        %v1752 = vld [vmem:[%s1751] sm:$0xf]
        %v1754 = vsel %vm638, %v1750, 0
        %v1757 = vsel %vm707, %v1752, 0
        %1759 = vmatprep.subr.bf16.mxu0 0
        %1760 = vmatpush1.bf16.msra.mxu0 %v1757
        %1761 = vmatprep.subr.bf16.mxu0 0
        %1762 = vmatpush1.bf16.msra.mxu0 0
        %1763 = vmatprep.subr.bf16.mxu0 0
        %1764 = vmatpush1.bf16.msra.mxu0 0
        %1765 = vmatprep.subr.bf16.mxu0 0
        %1766 = vmatpush1.bf16.msra.mxu0 0
        %1767 = vmatprep.subr.bf16.mxu0 0
        %1768 = vmatpush1.bf16.msra.mxu0 0
        %1769 = vmatprep.subr.bf16.mxu0 0
        %1770 = vmatpush1.bf16.msra.mxu0 0
        %1771 = vmatprep.subr.bf16.mxu0 0
        %1772 = vmatpush1.bf16.msra.mxu0 0
        %1773 = vmatprep.subr.bf16.mxu0 0
        %1774 = vmatpush1.bf16.msra.mxu0 0
        %1775 = vmatprep.subr.bf16.mxu0 0
        %1776 = vmatpush1.bf16.msra.mxu0 0
        %1777 = vmatprep.subr.bf16.mxu0 0
        %1778 = vmatpush1.bf16.msra.mxu0 0
        %1779 = vmatprep.subr.bf16.mxu0 0
        %1780 = vmatpush1.bf16.msra.mxu0 0
        %1781 = vmatprep.subr.bf16.mxu0 0
        %1782 = vmatpush1.bf16.msra.mxu0 0
        %1783 = vmatprep.subr.bf16.mxu0 0
        %1784 = vmatpush1.bf16.msra.mxu0 0
        %1785 = vmatprep.subr.bf16.mxu0 0
        %1786 = vmatpush1.bf16.msra.mxu0 0
        %1787 = vmatprep.subr.bf16.mxu0 0
        %1788 = vmatpush1.bf16.msra.mxu0 0
        %1789 = vmatprep.subr.bf16.mxu0 0
        %1790 = vmatpush1.bf16.msra.mxu0 0
        %1791 = vmatprep.mubr.bf16.mxu0 0
        %1792 = vmatmul.mubr.bf16.gmra.mrb[0].mxu0 %v1754
        %v1793 = vpop.f32.mrb[0].mxu0
        %v1794 = vadd.f32 0.0, %v1793
        %v1795 = vpop.f32.mrb[0].mxu0
        %v1796 = vpop.f32.mrb[0].mxu0
        %v1797 = vpop.f32.mrb[0].mxu0
        %1798 = vdwg.mxu0
        %v1799 = vadd.f32 %v1465, %v1794
        %v1800 = vadd.f32 %v462, %v1799
        %v1801 = vsel %vm480, %v1800, 0.0
        %1802 = vadd.xlane.f32.xlu0 %v1801
        %v1803 = vpop.xlane.xlu0 %1802
        %v1804 = vrcp.pop 32.0
        %v1805 = vmul.f32 %v1803, %v1804
        %v1806 = vsub.f32 %v1800, %v1805
        %v1807 = vmul.f32 %v1806, %v1806
        %v1808 = vsel %vm480, %v1807, 0.0
        %1809 = vadd.xlane.f32.xlu0 %v1808
        %v1810 = vpop.xlane.xlu0 %1809
        %v1811 = vmul.f32 %v1810, %v1804
        %v1812 = vadd.f32 %v1811, 1e-05
        %v1813 = vrsqrt.pop %v1812
        %v1814 = vmul.f32 %v1806, %v1813
        %v1815 = vld [vmem:[%s5] sm:$0x1]
        %v1817 = vlaneseq
        %v1818 = vshrl.u32 %v1817, 7
        %v1819 = vsub.s32 0, %v1818
        %v1820 = vrot.slane %v1815, %v1819
        %v1822 = vmul.f32 %v1814, %v1820
        %v1823 = vld [vmem:[%s6] sm:$0x1]
        %v1825 = vlaneseq
        %v1826 = vshrl.u32 %v1825, 7
        %v1827 = vsub.s32 0, %v1826
        %v1828 = vrot.slane %v1823, %v1827
        %v1830 = vadd.f32 %v1822, %v1828
        %v1831 = vpack.c.bf16 %v1830, %v1830
        %v1832 = vld [vmem:[%s7] sm:$0xf]
        %v1833 = vld [vmem:[%s7 + $0x4] sm:$0xf]
        %v1834 = vld [vmem:[%s7 + $0x8] sm:$0xf]
        %v1835 = vld [vmem:[%s7 + $0xc] sm:$0xf]
        %v1836 = vld [vmem:[%s8] sm:$0x1]
        %v1838 = vlaneseq
        %v1839 = vshrl.u32 %v1838, 7
        %v1840 = vsub.s32 0, %v1839
        %v1841 = vrot.slane %v1836, %v1840
        %v1847 = vunpack.c.l.b16 %v1832
        %v1848 = vunpack.c.l.b16 %v1833
        %v1849 = vunpack.c.l.b16 %v1834
        %v1850 = vunpack.c.l.b16 %v1835
        %v1851 = vpack.c.b16 %v1848, %v1847
        %v1852 = vpack.c.b16 %v1850, %v1849
        %v1856 = vsel %vm480, %v1831, 0
        %1858 = vmatprep.subr.bf16.mxu0 0
        %1859 = vmatpush1.bf16.msra.mxu0 %v1851
        %1860 = vmatprep.subr.bf16.mxu0 0
        %1861 = vmatpush1.bf16.msra.mxu0 %v1852
        %1862 = vmatprep.subr.bf16.mxu0 0
        %1863 = vmatpush1.bf16.msra.mxu0 0
        %1864 = vmatprep.subr.bf16.mxu0 0
        %1865 = vmatpush1.bf16.msra.mxu0 0
        %1866 = vmatprep.subr.bf16.mxu0 0
        %1867 = vmatpush1.bf16.msra.mxu0 0
        %1868 = vmatprep.subr.bf16.mxu0 0
        %1869 = vmatpush1.bf16.msra.mxu0 0
        %1870 = vmatprep.subr.bf16.mxu0 0
        %1871 = vmatpush1.bf16.msra.mxu0 0
        %1872 = vmatprep.subr.bf16.mxu0 0
        %1873 = vmatpush1.bf16.msra.mxu0 0
        %1874 = vmatprep.subr.bf16.mxu0 0
        %1875 = vmatpush1.bf16.msra.mxu0 0
        %1876 = vmatprep.subr.bf16.mxu0 0
        %1877 = vmatpush1.bf16.msra.mxu0 0
        %1878 = vmatprep.subr.bf16.mxu0 0
        %1879 = vmatpush1.bf16.msra.mxu0 0
        %1880 = vmatprep.subr.bf16.mxu0 0
        %1881 = vmatpush1.bf16.msra.mxu0 0
        %1882 = vmatprep.subr.bf16.mxu0 0
        %1883 = vmatpush1.bf16.msra.mxu0 0
        %1884 = vmatprep.subr.bf16.mxu0 0
        %1885 = vmatpush1.bf16.msra.mxu0 0
        %1886 = vmatprep.subr.bf16.mxu0 0
        %1887 = vmatpush1.bf16.msra.mxu0 0
        %1888 = vmatprep.subr.bf16.mxu0 0
        %1889 = vmatpush1.bf16.msra.mxu0 0
        %1890 = vmatprep.mubr.bf16.mxu0 0
        %1891 = vmatmul.mubr.bf16.gmra.mrb[0].mxu0 %v1856
        %v1892 = vpop.f32.mrb[0].mxu0
        %v1893 = vadd.f32 %v1841, %v1892
        %v1894 = vpop.f32.mrb[0].mxu0
        %v1895 = vpop.f32.mrb[0].mxu0
        %v1896 = vpop.f32.mrb[0].mxu0
        %1897 = vdwg.mxu0
        %v1898 = vmax.f32 %v1893, 0.0
        %v1899 = vpack.c.bf16 %v1898, %v1898
        %v1900 = vld [vmem:[%s9] sm:$0xf]
        %v1901 = vld [vmem:[%s9 + $0x4] sm:$0xf]
        %v1902 = vld [vmem:[%s9 + $0x8] sm:$0xf]
        %v1903 = vld [vmem:[%s9 + $0xc] sm:$0xf]
        %v1904 = vld [vmem:[%s9 + $0x10] sm:$0xf]
        %v1905 = vld [vmem:[%s9 + $0x14] sm:$0xf]
        %v1906 = vld [vmem:[%s9 + $0x18] sm:$0xf]
        %v1907 = vld [vmem:[%s9 + $0x1c] sm:$0xf]
        %v1908 = vld [vmem:[%s10] sm:$0x1]
        %v1910 = vlaneseq
        %v1911 = vshrl.u32 %v1910, 7
        %v1912 = vsub.s32 0, %v1911
        %v1913 = vrot.slane %v1908, %v1912
        %v1923 = vunpack.c.l.b16 %v1900
        %v1924 = vunpack.c.l.b16 %v1901
        %v1925 = vunpack.c.l.b16 %v1902
        %v1926 = vunpack.c.l.b16 %v1903
        %v1927 = vunpack.c.l.b16 %v1904
        %v1928 = vunpack.c.l.b16 %v1905
        %v1929 = vunpack.c.l.b16 %v1906
        %v1930 = vunpack.c.l.b16 %v1907
        %v1931 = vpack.c.b16 %v1924, %v1923
        %v1932 = vpack.c.b16 %v1926, %v1925
        %v1933 = vpack.c.b16 %v1928, %v1927
        %v1934 = vpack.c.b16 %v1930, %v1929
        %vm1939 = vcmask 523264
        %v1941 = vsel %vm1939, %v1899, 0
        %1943 = vmatprep.subr.bf16.mxu0 0
        %1944 = vmatpush1.bf16.msra.mxu0 %v1931
        %1945 = vmatprep.subr.bf16.mxu0 0
        %1946 = vmatpush1.bf16.msra.mxu0 %v1932
        %1947 = vmatprep.subr.bf16.mxu0 0
        %1948 = vmatpush1.bf16.msra.mxu0 %v1933
        %1949 = vmatprep.subr.bf16.mxu0 0
        %1950 = vmatpush1.bf16.msra.mxu0 %v1934
        %1951 = vmatprep.subr.bf16.mxu0 0
        %1952 = vmatpush1.bf16.msra.mxu0 0
        %1953 = vmatprep.subr.bf16.mxu0 0
        %1954 = vmatpush1.bf16.msra.mxu0 0
        %1955 = vmatprep.subr.bf16.mxu0 0
        %1956 = vmatpush1.bf16.msra.mxu0 0
        %1957 = vmatprep.subr.bf16.mxu0 0
        %1958 = vmatpush1.bf16.msra.mxu0 0
        %1959 = vmatprep.subr.bf16.mxu0 0
        %1960 = vmatpush1.bf16.msra.mxu0 0
        %1961 = vmatprep.subr.bf16.mxu0 0
        %1962 = vmatpush1.bf16.msra.mxu0 0
        %1963 = vmatprep.subr.bf16.mxu0 0
        %1964 = vmatpush1.bf16.msra.mxu0 0
        %1965 = vmatprep.subr.bf16.mxu0 0
        %1966 = vmatpush1.bf16.msra.mxu0 0
        %1967 = vmatprep.subr.bf16.mxu0 0
        %1968 = vmatpush1.bf16.msra.mxu0 0
        %1969 = vmatprep.subr.bf16.mxu0 0
        %1970 = vmatpush1.bf16.msra.mxu0 0
        %1971 = vmatprep.subr.bf16.mxu0 0
        %1972 = vmatpush1.bf16.msra.mxu0 0
        %1973 = vmatprep.subr.bf16.mxu0 0
        %1974 = vmatpush1.bf16.msra.mxu0 0
        %1975 = vmatprep.mubr.bf16.mxu0 0
        %1976 = vmatmul.mubr.bf16.gmra.mrb[0].mxu0 %v1941
        %v1977 = vpop.f32.mrb[0].mxu0
        %v1978 = vadd.f32 %v1913, %v1977
        %v1979 = vpop.f32.mrb[0].mxu0
        %v1980 = vpop.f32.mrb[0].mxu0
        %v1981 = vpop.f32.mrb[0].mxu0
        %1982 = vdwg.mxu0
        %v1983 = vadd.f32 %v1830, %v1978
        %v1984 = vsel %vm480, %v1983, 0.0
        %1985 = vadd.xlane.f32.xlu0 %v1984
        %v1986 = vpop.xlane.xlu0 %1985
        %v1987 = vmul.f32 %v1986, %v1804
        %v1988 = vsub.f32 %v1983, %v1987
        %v1989 = vmul.f32 %v1988, %v1988
        %v1990 = vsel %vm480, %v1989, 0.0
        %1991 = vadd.xlane.f32.xlu0 %v1990
        %v1992 = vpop.xlane.xlu0 %1991
        %v1993 = vmul.f32 %v1992, %v1804
        %v1994 = vadd.f32 %v1993, 1e-05
        %v1995 = vrsqrt.pop %v1994
        %v1996 = vmul.f32 %v1988, %v1995
        %v1997 = vld [vmem:[%s11] sm:$0x1]
        %v1999 = vlaneseq
        %v2000 = vshrl.u32 %v1999, 7
        %v2001 = vsub.s32 0, %v2000
        %v2002 = vrot.slane %v1997, %v2001
        %v2004 = vmul.f32 %v1996, %v2002
        %v2005 = vld [vmem:[%s12] sm:$0x1]
        %v2007 = vlaneseq
        %v2008 = vshrl.u32 %v2007, 7
        %v2009 = vsub.s32 0, %v2008
        %v2010 = vrot.slane %v2005, %v2009
        %v2012 = vadd.f32 %v2004, %v2010
        %2013 = vst.msk [vmem:[%s453] sm:$0xff] %vm480, %v2012
        %s2014 = sand.u32 %s329, 1
        %s2015 = scalar_lea.sflag [#allocation3], %s2014
        %s2016 = sand.u32 %s329, 1
        %s2017 = smul.addr %s2016, 8
        %s2018 = scalar_lea.vmem [#allocation2], %s2017
        // Predicated region
        $region73: #{tpu_custom_call.1} parent=71 // pred_check
          %p2019 = pneg %p339
        $region74: #{tpu_custom_call.1} parent=71 // pred_check_branch
          %2021 = sbr.rel (%p2019) target = $region76
        $region75: #{tpu_custom_call.1} parent=71 // pred_region
          %s2023 = ssub.s32 128, 128
          %2024 = vsyncadd %s2015, %s2023
          %s2025 = sadd.s32 %s32, %s31
          %s2026 = smul.addr %s2025, 128
          %s2027 = scalar_lea.hbm %s13, %s2026
          %s2029 = sshll.u32 %s2018, 4
          %s2030 = int_to_ptr.vmem [resolvable:$true] %s2029
          %2032 = dma.vmem_to_hbm [thread:$0]  %s2030, 128, %s2027, %s2015
        $region76: #{tpu_custom_call.1} parent=71 // pred_fallthru
          _
      $region72: #{tpu_custom_call.1} parent=5 // pred_fallthru
        _
      %p2033 = scmp.le.s32.totalorder 2, %s22
      // Predicated region
      $region77: #{tpu_custom_call.1} parent=5 // pred_check
        %p2034 = pneg %p2033
      $region78: #{tpu_custom_call.1} parent=5 // pred_check_branch
        %2036 = sbr.rel (%p2034) target = $region80
      $region79: #{tpu_custom_call.1} parent=5 // pred_region
        %s2037 = ssub.s32 %s22, 2
        // Predicated region
        $region81: #{tpu_custom_call.1} parent=79 // pred_check
          %p2038 = pneg %p345
        $region82: #{tpu_custom_call.1} parent=79 // pred_check_branch
          %2040 = sbr.rel (%p2038) target = $region84
        $region83: #{tpu_custom_call.1} parent=79 // pred_region
          %s2041 = sand.u32 %s330, 1
          %s2042 = scalar_lea.sflag [#allocation3], %s2041
          %s2043 = sand.u32 %s330, 1
          %s2044 = smul.addr %s2043, 8
          %s2045 = scalar_lea.vmem [#allocation2], %s2044
          %2046 = dma.done %s2042, 128
        $region84: #{tpu_custom_call.1} parent=79 // pred_fallthru
          _
      $region80: #{tpu_custom_call.1} parent=5 // pred_fallthru
        _
    $region6: #{tpu_custom_call.1} parent=1 // loop_footer
      %s26 = sadd.s32 1, %s22
    $region7: #{tpu_custom_call.1} parent=1 // loop_footer_branch
      %21 = sbr.rel target = $region3
    $region8: #{tpu_custom_call.1} parent=1 // loop_exit
      _
    %2047 = vsyncpa [#allocation3], 1
    %s2048 = scalar_lea.sflag [#allocation3], 1
    %2049 = vsyncpa %s2048, 1

</llo_original>
